<compile_context>
chip_gen: v7x
topology: tpu7x:2x2x1
jax: 0.10.0
libtpu: 0.0.40
codegen_flags: <defaults>
</compile_context>

<pallas_src>
import functools

import numpy as np
import jax
import jax.numpy as jnp
from jax.experimental import pallas as pl
from jax.experimental.pallas import tpu as pltpu


# -----------------------------------------------------------------------------
# Kernel A: spatial conv (single im2col matmul over T*HW lanes) + ReLU,
#           temporal conv (single 3-tap stacked matmul) + ReLU,
#           per-sample per-channel moments packed into one small output.
# -----------------------------------------------------------------------------
def _conv_fused_kernel(xcol_ref, wcol_ref, wtc_ref,
                       fea1_ref, fea2_ref, stats_ref, *, hw):
    # xcol_ref : (1, 9*Cin, T*HW)  im2col'd input, lane axis = T*HW
    # wcol_ref : (C, 9*Cin)        spatial weights, matmul-ready
    # wtc_ref  : (C, 3*C)          temporal weights, [cout, k*C + cin]
    # fea1/2   : (1, C, T*HW)      bf16 activations (inter-kernel interface)
    # stats    : (1, C, 5)         S1, S2, S11, S22, S12 (f32)
    C = wcol_ref.shape[0]
    thw = fea1_ref.shape[2]

    # Spatial 3x3 conv + ReLU: one (C, 9Cin) @ (9Cin, T*HW) matmul for the whole
    # sample (amortizes MXU weight push / result drain; 1024-lane wide issues).
    f1 = jnp.maximum(
        jnp.dot(wcol_ref[...], xcol_ref[0], preferred_element_type=jnp.float32),
        0.0)                                                      # (C, T*HW)

    # Temporal (3,1,1) conv + ReLU: frame shifts are 128-aligned lane slices of
    # f1 (HW % 128 == 0 here); the 3 taps become one (C,3C) @ (3C,T*HW) matmul.
    zf = jnp.zeros((C, hw), jnp.float32)
    prev = jnp.concatenate([zf, f1[:, :thw - hw]], axis=1)        # fea1[t-1]
    nxt = jnp.concatenate([f1[:, hw:], zf], axis=1)               # fea1[t+1]
    stacked = jnp.concatenate([prev, f1, nxt], axis=0)            # (3C, T*HW)
    f2 = jnp.maximum(
        jnp.dot(wtc_ref[...], stacked, preferred_element_type=jnp.float32),
        0.0)                                                      # (C, T*HW)

    # Store inter-kernel activations as bf16 (math above stays f32 — v5e-safe).
    fea1_ref[0] = f1.astype(fea1_ref.dtype)
    fea2_ref[0] = f2.astype(fea2_ref.dtype)

    # Per-channel moments, folded in while f1/f2 are live (no activation
    # re-read), packed into a single tiny output (one DMA per sample).
    stats_ref[0, :, 0:1] = jnp.sum(f1, axis=1, keepdims=True)
    stats_ref[0, :, 1:2] = jnp.sum(f2, axis=1, keepdims=True)
    stats_ref[0, :, 2:3] = jnp.sum(f1 * f1, axis=1, keepdims=True)
    stats_ref[0, :, 3:4] = jnp.sum(f2 * f2, axis=1, keepdims=True)
    stats_ref[0, :, 4:5] = jnp.sum(f1 * f2, axis=1, keepdims=True)


def conv_fused(xcol, w_col, wt_cat, hw):
    N, K9, THW = xcol.shape
    C = w_col.shape[0]
    kern = functools.partial(_conv_fused_kernel, hw=hw)
    fea_shape = jax.ShapeDtypeStruct((N, C, THW), jnp.bfloat16)
    fea_spec = pl.BlockSpec((1, C, THW), lambda n: (n, 0, 0))
    # TODO(synk): for large T*H*W, tile the lane axis in the grid (moment
    # accumulation across lane tiles) and raise vmem_limit_bytes explicitly
    # (v5e 16 MiB scoped default, v7x 64 MiB total VMEM).
    return pl.pallas_call(
        kern,
        out_shape=(fea_shape, fea_shape,
                   jax.ShapeDtypeStruct((N, C, 5), jnp.float32)),
        grid=(N,),
        in_specs=[
            pl.BlockSpec((1, K9, THW), lambda n: (n, 0, 0)),
            pl.BlockSpec((C, K9), lambda n: (0, 0)),
            pl.BlockSpec((C, 3 * C), lambda n: (0, 0)),
        ],
        out_specs=(fea_spec, fea_spec,
                   pl.BlockSpec((1, C, 5), lambda n: (n, 0, 0))),
        compiler_params=pltpu.CompilerParams(
            dimension_semantics=("parallel",)),
    )(xcol, w_col, wt_cat)


# -----------------------------------------------------------------------------
# Kernel B: y = relu(fea1*a1 + fea2*a2 + shift)   with a1 = v1*bn_scale,
#           a2 = v2*bn_scale pre-folded.  bf16 in, f32 math, f32 out in
#           (N, C, T*HW) layout so NCDHW is a free reshape afterwards.
# -----------------------------------------------------------------------------
def _combine_bn_relu_kernel(f1_ref, f2_ref, a1_ref, a2_ref, sh_ref, o_ref):
    # f1/f2 : (1, C, L) bf16 ; a1/a2 : (1, C, 1) f32 ; sh : (C, 1) ; o : (1, C, L) f32
    f1 = f1_ref[...].astype(jnp.float32)
    f2 = f2_ref[...].astype(jnp.float32)
    o_ref[...] = jnp.maximum(
        f1 * a1_ref[...] + f2 * a2_ref[...] + sh_ref[...], 0.0)


def combine_bn_relu(fea1, fea2, a1, a2, shift):
    N, C, THW = fea1.shape
    # 2-way lane split gives the v7x megacore more than N parallel steps when
    # N is tiny; chunks stay 128-aligned (fall back to 1 chunk otherwise).
    S = 2 if THW % 256 == 0 else 1
    L = THW // S
    fea_spec = pl.BlockSpec((1, C, L), lambda n, s: (n, 0, s))
    vec_spec = pl.BlockSpec((1, C, 1), lambda n, s: (n, 0, 0))
    return pl.pallas_call(
        _combine_bn_relu_kernel,
        out_shape=jax.ShapeDtypeStruct((N, C, THW), jnp.float32),
        grid=(N, S),
        in_specs=[fea_spec, fea_spec, vec_spec, vec_spec,
                  pl.BlockSpec((C, 1), lambda n, s: (0, 0))],
        out_specs=fea_spec,
        compiler_params=pltpu.CompilerParams(
            dimension_semantics=("parallel", "parallel")),
    )(fea1, fea2, a1, a2, shift)


# -----------------------------------------------------------------------------
# Full forward.  Hot paths in the two kernels above; the tiny attention matmuls
# and the scalar BN-statistics algebra stay in plain JAX.
# -----------------------------------------------------------------------------
def sssa_forward(x_ncdhw, params):
    N, Cin, T, H, W = x_ncdhw.shape
    w_sp = params["w_spatial"]                        # (3, 3, Cin, Cout)
    Cout = w_sp.shape[-1]
    HW = H * W
    THW = T * HW

    # im2col laid out (N, 9*Cin, T*HW) so Kernel A issues ONE matmul per sample.
    # TODO(synk): at large H*W*Cin build the 9 taps in-kernel from a padded VMEM
    # block (lane shifts + masks) instead of materializing the 9x copy in HBM.
    xt = jnp.transpose(x_ncdhw, (0, 2, 1, 3, 4))      # (N, T, Cin, H, W)
    xp = jnp.pad(xt, ((0, 0), (0, 0), (0, 0), (1, 1), (1, 1)))
    taps = [xp[:, :, :, dh:dh + H, dw:dw + W]
            for dh in range(3) for dw in range(3)]
    xcol = jnp.stack(taps, axis=1)                    # (N, 9, T, Cin, H, W)
    xcol = jnp.transpose(xcol, (0, 1, 3, 2, 4, 5))    # (N, 9, Cin, T, H, W)
    xcol = xcol.reshape(N, 9 * Cin, THW)

    w_col = w_sp.reshape(9 * Cin, Cout).T             # (Cout, 9*Cin)
    wt_cat = jnp.transpose(params["w_temporal"], (2, 0, 1)).reshape(Cout, 3 * Cout)

    fea1, fea2, stats = conv_fused(xcol, w_col, wt_cat, HW)
    S1, S2 = stats[:, :, 0], stats[:, :, 1]           # (N, C)
    S11, S22, S12 = stats[:, :, 2], stats[:, :, 3], stats[:, :, 4]

    # --- channel attention (tiny, plain JAX) ---
    gap = S2 / float(T * HW)                          # (N, C)
    z = gap @ params["fc_w"] + params["fc_b"]
    v1 = jax.nn.softmax(z @ params["fcs1_w"] + params["fcs1_b"], axis=1)
    v2 = jax.nn.softmax(z @ params["fcs2_w"] + params["fcs2_b"], axis=1)

    # --- training-mode BatchNorm3d statistics of fea_v, computed analytically
    #     from the per-sample channel moments (no extra activation pass).
    #     (E[x^2]-E[x]^2 form; adequate at the tested tolerance.) ---
    count = float(N * T * HW)
    sum_fv = v1 * S1 + v2 * S2
    sum_fv2 = v1 * v1 * S11 + 2.0 * v1 * v2 * S12 + v2 * v2 * S22
    mean = jnp.sum(sum_fv, axis=0) / count            # (C,)
    var = jnp.sum(sum_fv2, axis=0) / count - mean * mean
    inv = jax.lax.rsqrt(var + 1e-5)
    scale = params["bn_gamma"] * inv
    shift = params["bn_beta"] - mean * scale

    # Pre-fold attention + BN scale so Kernel B is relu(f1*a1 + f2*a2 + shift).
    a1 = v1 * scale[None, :]                          # (N, C)
    a2 = v2 * scale[None, :]

    y = combine_bn_relu(fea1, fea2, a1[..., None], a2[..., None],
                        shift[:, None])               # (N, Cout, T*HW)
    # (N, C, T*HW) -> NCDHW is a free row-major reshape (no XLA transpose).
    return y.reshape(N, Cout, T, H, W)


# -----------------------------------------------------------------------------
# Pure-JAX reference (same math as the PyTorch module, all f32) for verification
# -----------------------------------------------------------------------------
def sssa_reference(x_ncdhw, params):
    x = jnp.transpose(x_ncdhw, (0, 2, 3, 4, 1))
    N, T, H, W, Cin = x.shape
    w = params["w_spatial"]
    Cout = w.shape[-1]
    xp = jnp.pad(x, ((0, 0), (0, 0), (1, 1), (1, 1), (0, 0)))
    fea1 = jnp.zeros((N, T, H, W, Cout), jnp.float32)
    for dh in range(3):
        for dw in range(3):
            fea1 = fea1 + jnp.einsum("nthwc,cd->nthwd",
                                     xp[:, :, dh:dh + H, dw:dw + W, :],
                                     w[dh, dw])
    fea1 = jnp.maximum(fea1, 0.0)

    wt = params["w_temporal"]
    f1p = jnp.pad(fea1, ((0, 0), (1, 1), (0, 0), (0, 0), (0, 0)))
    fea2 = jnp.zeros_like(fea1)
    for k in range(3):
        fea2 = fea2 + jnp.einsum("nthwc,cd->nthwd", f1p[:, k:k + T], wt[k])
    fea2 = jnp.maximum(fea2, 0.0)

    s = jnp.mean(fea2, axis=(1, 2, 3))                        # (N, C)
    z = s @ params["fc_w"] + params["fc_b"]
    l1 = z @ params["fcs1_w"] + params["fcs1_b"]
    l2 = z @ params["fcs2_w"] + params["fcs2_b"]
    v1 = jax.nn.softmax(l1, axis=1)
    v2 = jax.nn.softmax(l2, axis=1)
    fv = fea1 * v1[:, None, None, None, :] + fea2 * v2[:, None, None, None, :]

    mean = jnp.mean(fv, axis=(0, 1, 2, 3))
    var = jnp.mean((fv - mean) ** 2, axis=(0, 1, 2, 3))
    y = (fv - mean) * jax.lax.rsqrt(var + 1e-5) * params["bn_gamma"] \
        + params["bn_beta"]
    y = jnp.maximum(y, 0.0)
    return jnp.transpose(y, (0, 4, 1, 2, 3))


def init_params(key, features, oup, d):
    ks = jax.random.split(key, 8)
    return {
        # conv weights stored channels-last / matmul-ready:
        #   spatial (kh, kw, Cin, Cout) ; temporal (kt, Cin, Cout)
        "w_spatial": jax.random.normal(ks[0], (3, 3, features, oup), jnp.float32) * 0.2,
        "w_temporal": jax.random.normal(ks[1], (3, oup, oup), jnp.float32) * 0.2,
        "fc_w": jax.random.normal(ks[2], (oup, d), jnp.float32) * 0.2,
        "fc_b": jax.random.normal(ks[3], (1, d), jnp.float32) * 0.1,
        "fcs1_w": jax.random.normal(ks[4], (d, oup), jnp.float32) * 0.2,
        "fcs1_b": jax.random.normal(ks[5], (1, oup), jnp.float32) * 0.1,
        "fcs2_w": jax.random.normal(ks[6], (d, oup), jnp.float32) * 0.2,
        "fcs2_b": jax.random.normal(ks[7], (1, oup), jnp.float32) * 0.1,
        "bn_gamma": jnp.ones((oup,), jnp.float32),
        "bn_beta": jnp.zeros((oup,), jnp.float32),
    }


if __name__ == "__main__":
    # small shapes: SSSA(features=4, oup=8, r=2, stride=1, L=16) -> d=16
    N, features, oup, T, H, W = 2, 4, 8, 4, 16, 16
    r, L = 2, 16
    d = max(int(features / r), L)

    key = jax.random.PRNGKey(0)
    kx, kp = jax.random.split(key)
    x = jax.random.normal(kx, (N, features, T, H, W), jnp.float32)   # NCDHW
    params = init_params(kp, features, oup, d)

    fwd = jax.jit(sssa_forward)
    out = jax.block_until_ready(fwd(x, params))
    assert out.shape == (N, oup, T, H, W)

    ref = sssa_reference(x, params)
    # Tolerance accounts for the intentional bf16 storage of fea1/fea2 between
    # the two kernels (the only deviation from the all-f32 reference).
    np.testing.assert_allclose(np.asarray(out), np.asarray(ref),
                               atol=2e-2, rtol=2e-2)
    print("KERNEL_OK")
</pallas_src>

<mosaic_0001>
module attributes {stable_mosaic.version = 11 : i64} {
  func.func @_conv_fused_kernel(%arg0: i32, %arg1: memref<1x36x1024xf32, #tpu.memory_space<vmem>>, %arg2: memref<8x36xf32, #tpu.memory_space<vmem>>, %arg3: memref<8x24xf32, #tpu.memory_space<vmem>>, %arg4: memref<1x8x1024xbf16, #tpu.memory_space<vmem>>, %arg5: memref<1x8x1024xbf16, #tpu.memory_space<vmem>>, %arg6: memref<1x8x5xf32, #tpu.memory_space<vmem>>) attributes {dimension_semantics = [#tpu.dimension_semantics<parallel>], iteration_bounds = array<i64: 2>, scalar_prefetch = 0 : i64, scratch_operands = 0 : i64, tpu.core_type = #tpu.core_type<tc>, window_params = [{transform_indices = @transform_0, window_bounds = array<i64: 1, 36, 1024>}, {pipeline_mode = #tpu.pipeline_mode<synchronous>, transform_indices = @transform_1, window_bounds = array<i64: 8, 36>}, {pipeline_mode = #tpu.pipeline_mode<synchronous>, transform_indices = @transform_2, window_bounds = array<i64: 8, 24>}, {transform_indices = @transform_3, window_bounds = array<i64: 1, 8, 1024>}, {transform_indices = @transform_4, window_bounds = array<i64: 1, 8, 1024>}, {transform_indices = @transform_5, window_bounds = array<i64: 1, 8, 5>}]} {
    %c0 = arith.constant 0 : index
    %c0_0 = arith.constant 0 : index
    %0 = vector.load %arg2[%c0, %c0_0] : memref<8x36xf32, #tpu.memory_space<vmem>>, vector<8x36xf32>
    %c0_1 = arith.constant 0 : index
    %c0_2 = arith.constant 0 : index
    %c0_3 = arith.constant 0 : index
    %1 = vector.load %arg1[%c0_1, %c0_2, %c0_3] : memref<1x36x1024xf32, #tpu.memory_space<vmem>>, vector<1x36x1024xf32>
    %2 = vector.shape_cast %1 : vector<1x36x1024xf32> to vector<36x1024xf32>
    %cst = arith.constant dense<0.000000e+00> : vector<8x1024xf32>
    %3 = tpu.matmul %0, %2, %cst {dimension_numbers = #tpu.dot_dimension_numbers<[1], [0], [0], [1], [0, 0, 1, 1], [], []>} : vector<8x36xf32>, vector<36x1024xf32>, vector<8x1024xf32> -> vector<8x1024xf32>
    %cst_4 = arith.constant 0.000000e+00 : f32
    %4 = vector.broadcast %cst_4 : f32 to vector<8x1024xf32>
    %5 = arith.maximumf %3, %4 : vector<8x1024xf32>
    %cst_5 = arith.constant 0.000000e+00 : f32
    %6 = vector.broadcast %cst_5 : f32 to vector<8x256xf32>
    %7 = vector.extract_strided_slice %5 {offsets = [0, 0], sizes = [8, 768], strides = [1, 1]} : vector<8x1024xf32> to vector<8x768xf32>
    %8 = tpu.concatenate %6, %7 in 1 : vector<8x256xf32>, vector<8x768xf32> -> vector<8x1024xf32>
    %9 = vector.extract_strided_slice %5 {offsets = [0, 256], sizes = [8, 768], strides = [1, 1]} : vector<8x1024xf32> to vector<8x768xf32>
    %10 = tpu.concatenate %9, %6 in 1 : vector<8x768xf32>, vector<8x256xf32> -> vector<8x1024xf32>
    %11 = tpu.concatenate %8, %5, %10 in 0 : vector<8x1024xf32>, vector<8x1024xf32>, vector<8x1024xf32> -> vector<24x1024xf32>
    %c0_6 = arith.constant 0 : index
    %c0_7 = arith.constant 0 : index
    %12 = vector.load %arg3[%c0_6, %c0_7] : memref<8x24xf32, #tpu.memory_space<vmem>>, vector<8x24xf32>
    %cst_8 = arith.constant dense<0.000000e+00> : vector<8x1024xf32>
    %13 = tpu.matmul %12, %11, %cst_8 {dimension_numbers = #tpu.dot_dimension_numbers<[1], [0], [0], [1], [0, 0, 1, 1], [], []>} : vector<8x24xf32>, vector<24x1024xf32>, vector<8x1024xf32> -> vector<8x1024xf32>
    %cst_9 = arith.constant 0.000000e+00 : f32
    %14 = vector.broadcast %cst_9 : f32 to vector<8x1024xf32>
    %15 = arith.maximumf %13, %14 : vector<8x1024xf32>
    %16 = arith.truncf %5 : vector<8x1024xf32> to vector<8x1024xbf16>
    %c0_10 = arith.constant 0 : index
    %c0_11 = arith.constant 0 : index
    %c0_12 = arith.constant 0 : index
    %17 = vector.load %arg4[%c0_10, %c0_11, %c0_12] : memref<1x8x1024xbf16, #tpu.memory_space<vmem>>, vector<1x8x1024xbf16>
    %18 = vector.shape_cast %17 : vector<1x8x1024xbf16> to vector<8x1024xbf16>
    %19 = vector.shape_cast %16 : vector<8x1024xbf16> to vector<1x8x1024xbf16>
    tpu.vector_store %arg4[%c0_10, %c0_11, %c0_12], %19 {strides = array<i32>} : memref<1x8x1024xbf16, #tpu.memory_space<vmem>>, vector<1x8x1024xbf16>,
    %20 = arith.truncf %15 : vector<8x1024xf32> to vector<8x1024xbf16>
    %c0_13 = arith.constant 0 : index
    %c0_14 = arith.constant 0 : index
    %c0_15 = arith.constant 0 : index
    %21 = vector.load %arg5[%c0_13, %c0_14, %c0_15] : memref<1x8x1024xbf16, #tpu.memory_space<vmem>>, vector<1x8x1024xbf16>
    %22 = vector.shape_cast %21 : vector<1x8x1024xbf16> to vector<8x1024xbf16>
    %23 = vector.shape_cast %20 : vector<8x1024xbf16> to vector<1x8x1024xbf16>
    tpu.vector_store %arg5[%c0_13, %c0_14, %c0_15], %23 {strides = array<i32>} : memref<1x8x1024xbf16, #tpu.memory_space<vmem>>, vector<1x8x1024xbf16>,
    %cst_16 = arith.constant dense<0.000000e+00> : vector<8xf32>
    %24 = vector.multi_reduction <add>, %5, %cst_16 [1] : vector<8x1024xf32> to vector<8xf32>
    %25 = vector.shape_cast %24 : vector<8xf32> to vector<8x1xf32>
    %c0_17 = arith.constant 0 : index
    %c0_18 = arith.constant 0 : index
    %c0_19 = arith.constant 0 : index
    %26 = vector.load %arg6[%c0_17, %c0_18, %c0_19] : memref<1x8x5xf32, #tpu.memory_space<vmem>>, vector<1x8x1xf32>
    %27 = vector.shape_cast %26 : vector<1x8x1xf32> to vector<8x1xf32>
    %28 = vector.shape_cast %25 : vector<8x1xf32> to vector<1x8x1xf32>
    tpu.vector_store %arg6[%c0_17, %c0_18, %c0_19], %28 {strides = array<i32>} : memref<1x8x5xf32, #tpu.memory_space<vmem>>, vector<1x8x1xf32>,
    %cst_20 = arith.constant dense<0.000000e+00> : vector<8xf32>
    %29 = vector.multi_reduction <add>, %15, %cst_20 [1] : vector<8x1024xf32> to vector<8xf32>
    %30 = vector.shape_cast %29 : vector<8xf32> to vector<8x1xf32>
    %c0_21 = arith.constant 0 : index
    %c0_22 = arith.constant 0 : index
    %c1 = arith.constant 1 : index
    %31 = vector.load %arg6[%c0_21, %c0_22, %c1] : memref<1x8x5xf32, #tpu.memory_space<vmem>>, vector<1x8x1xf32>
    %32 = vector.shape_cast %31 : vector<1x8x1xf32> to vector<8x1xf32>
    %33 = vector.shape_cast %30 : vector<8x1xf32> to vector<1x8x1xf32>
    tpu.vector_store %arg6[%c0_21, %c0_22, %c1], %33 {strides = array<i32>} : memref<1x8x5xf32, #tpu.memory_space<vmem>>, vector<1x8x1xf32>,
    %34 = arith.mulf %5, %5 : vector<8x1024xf32>
    %cst_23 = arith.constant dense<0.000000e+00> : vector<8xf32>
    %35 = vector.multi_reduction <add>, %34, %cst_23 [1] : vector<8x1024xf32> to vector<8xf32>
    %36 = vector.shape_cast %35 : vector<8xf32> to vector<8x1xf32>
    %c0_24 = arith.constant 0 : index
    %c0_25 = arith.constant 0 : index
    %c2 = arith.constant 2 : index
    %37 = vector.load %arg6[%c0_24, %c0_25, %c2] : memref<1x8x5xf32, #tpu.memory_space<vmem>>, vector<1x8x1xf32>
    %38 = vector.shape_cast %37 : vector<1x8x1xf32> to vector<8x1xf32>
    %39 = vector.shape_cast %36 : vector<8x1xf32> to vector<1x8x1xf32>
    tpu.vector_store %arg6[%c0_24, %c0_25, %c2], %39 {strides = array<i32>} : memref<1x8x5xf32, #tpu.memory_space<vmem>>, vector<1x8x1xf32>,
    %40 = arith.mulf %15, %15 : vector<8x1024xf32>
    %cst_26 = arith.constant dense<0.000000e+00> : vector<8xf32>
    %41 = vector.multi_reduction <add>, %40, %cst_26 [1] : vector<8x1024xf32> to vector<8xf32>
    %42 = vector.shape_cast %41 : vector<8xf32> to vector<8x1xf32>
    %c0_27 = arith.constant 0 : index
    %c0_28 = arith.constant 0 : index
    %c3 = arith.constant 3 : index
    %43 = vector.load %arg6[%c0_27, %c0_28, %c3] : memref<1x8x5xf32, #tpu.memory_space<vmem>>, vector<1x8x1xf32>
    %44 = vector.shape_cast %43 : vector<1x8x1xf32> to vector<8x1xf32>
    %45 = vector.shape_cast %42 : vector<8x1xf32> to vector<1x8x1xf32>
    tpu.vector_store %arg6[%c0_27, %c0_28, %c3], %45 {strides = array<i32>} : memref<1x8x5xf32, #tpu.memory_space<vmem>>, vector<1x8x1xf32>,
    %46 = arith.mulf %5, %15 : vector<8x1024xf32>
    %cst_29 = arith.constant dense<0.000000e+00> : vector<8xf32>
    %47 = vector.multi_reduction <add>, %46, %cst_29 [1] : vector<8x1024xf32> to vector<8xf32>
    %48 = vector.shape_cast %47 : vector<8xf32> to vector<8x1xf32>
    %c0_30 = arith.constant 0 : index
    %c0_31 = arith.constant 0 : index
    %c4 = arith.constant 4 : index
    %49 = vector.load %arg6[%c0_30, %c0_31, %c4] : memref<1x8x5xf32, #tpu.memory_space<vmem>>, vector<1x8x1xf32>
    %50 = vector.shape_cast %49 : vector<1x8x1xf32> to vector<8x1xf32>
    %51 = vector.shape_cast %48 : vector<8x1xf32> to vector<1x8x1xf32>
    tpu.vector_store %arg6[%c0_30, %c0_31, %c4], %51 {strides = array<i32>} : memref<1x8x5xf32, #tpu.memory_space<vmem>>, vector<1x8x1xf32>,
    return
  }
  func.func @transform_0(%arg0: i32) -> (i32, i32, i32) {
    %c0_i32 = arith.constant 0 : i32
    %c0_i32_0 = arith.constant 0 : i32
    %c0_i32_1 = arith.constant 0 : i32
    return %arg0, %c0_i32, %c0_i32_0 : i32, i32, i32
  }
  func.func @transform_1(%arg0: i32) -> (i32, i32) {
    %c0_i32 = arith.constant 0 : i32
    %c0_i32_0 = arith.constant 0 : i32
    %c0_i32_1 = arith.constant 0 : i32
    return %c0_i32, %c0_i32_0 : i32, i32
  }
  func.func @transform_2(%arg0: i32) -> (i32, i32) {
    %c0_i32 = arith.constant 0 : i32
    %c0_i32_0 = arith.constant 0 : i32
    %c0_i32_1 = arith.constant 0 : i32
    return %c0_i32, %c0_i32_0 : i32, i32
  }
  func.func @transform_3(%arg0: i32) -> (i32, i32, i32) {
    %c0_i32 = arith.constant 0 : i32
    %c0_i32_0 = arith.constant 0 : i32
    %c0_i32_1 = arith.constant 0 : i32
    return %arg0, %c0_i32, %c0_i32_0 : i32, i32, i32
  }
  func.func @transform_4(%arg0: i32) -> (i32, i32, i32) {
    %c0_i32 = arith.constant 0 : i32
    %c0_i32_0 = arith.constant 0 : i32
    %c0_i32_1 = arith.constant 0 : i32
    return %arg0, %c0_i32, %c0_i32_0 : i32, i32, i32
  }
  func.func @transform_5(%arg0: i32) -> (i32, i32, i32) {
    %c0_i32 = arith.constant 0 : i32
    %c0_i32_0 = arith.constant 0 : i32
    %c0_i32_1 = arith.constant 0 : i32
    return %arg0, %c0_i32, %c0_i32_0 : i32, i32, i32
  }
}

module attributes {stable_mosaic.version = 11 : i64} {
  func.func @_combine_bn_relu_kernel(%arg0: i32, %arg1: i32, %arg2: memref<1x8x512xbf16, #tpu.memory_space<vmem>>, %arg3: memref<1x8x512xbf16, #tpu.memory_space<vmem>>, %arg4: memref<1x8x1xf32, #tpu.memory_space<vmem>>, %arg5: memref<1x8x1xf32, #tpu.memory_space<vmem>>, %arg6: memref<8x1xf32, #tpu.memory_space<vmem>>, %arg7: memref<1x8x512xf32, #tpu.memory_space<vmem>>) attributes {dimension_semantics = [#tpu.dimension_semantics<parallel>, #tpu.dimension_semantics<parallel>], iteration_bounds = array<i64: 2, 2>, scalar_prefetch = 0 : i64, scratch_operands = 0 : i64, tpu.core_type = #tpu.core_type<tc>, window_params = [{transform_indices = @transform_0, window_bounds = array<i64: 1, 8, 512>}, {transform_indices = @transform_1, window_bounds = array<i64: 1, 8, 512>}, {transform_indices = @transform_2, window_bounds = array<i64: 1, 8, 1>}, {transform_indices = @transform_3, window_bounds = array<i64: 1, 8, 1>}, {pipeline_mode = #tpu.pipeline_mode<synchronous>, transform_indices = @transform_4, window_bounds = array<i64: 8, 1>}, {transform_indices = @transform_5, window_bounds = array<i64: 1, 8, 512>}]} {
    %c0 = arith.constant 0 : index
    %c0_0 = arith.constant 0 : index
    %c0_1 = arith.constant 0 : index
    %0 = vector.load %arg2[%c0, %c0_0, %c0_1] : memref<1x8x512xbf16, #tpu.memory_space<vmem>>, vector<1x8x512xbf16>
    %1 = arith.extf %0 : vector<1x8x512xbf16> to vector<1x8x512xf32>
    %c0_2 = arith.constant 0 : index
    %c0_3 = arith.constant 0 : index
    %c0_4 = arith.constant 0 : index
    %2 = vector.load %arg3[%c0_2, %c0_3, %c0_4] : memref<1x8x512xbf16, #tpu.memory_space<vmem>>, vector<1x8x512xbf16>
    %3 = arith.extf %2 : vector<1x8x512xbf16> to vector<1x8x512xf32>
    %c0_5 = arith.constant 0 : index
    %c0_6 = arith.constant 0 : index
    %c0_7 = arith.constant 0 : index
    %4 = vector.load %arg4[%c0_5, %c0_6, %c0_7] : memref<1x8x1xf32, #tpu.memory_space<vmem>>, vector<1x8x1xf32>
    %5 = vector.broadcast %4 : vector<1x8x1xf32> to vector<1x8x512xf32>
    %6 = arith.mulf %1, %5 : vector<1x8x512xf32>
    %c0_8 = arith.constant 0 : index
    %c0_9 = arith.constant 0 : index
    %c0_10 = arith.constant 0 : index
    %7 = vector.load %arg5[%c0_8, %c0_9, %c0_10] : memref<1x8x1xf32, #tpu.memory_space<vmem>>, vector<1x8x1xf32>
    %8 = vector.broadcast %7 : vector<1x8x1xf32> to vector<1x8x512xf32>
    %9 = arith.mulf %3, %8 : vector<1x8x512xf32>
    %10 = arith.addf %6, %9 : vector<1x8x512xf32>
    %c0_11 = arith.constant 0 : index
    %c0_12 = arith.constant 0 : index
    %11 = vector.load %arg6[%c0_11, %c0_12] : memref<8x1xf32, #tpu.memory_space<vmem>>, vector<8x1xf32>
    %12 = vector.shape_cast %11 : vector<8x1xf32> to vector<1x8x1xf32>
    %13 = vector.broadcast %12 : vector<1x8x1xf32> to vector<1x8x512xf32>
    %14 = arith.addf %10, %13 : vector<1x8x512xf32>
    %cst = arith.constant 0.000000e+00 : f32
    %15 = vector.broadcast %cst : f32 to vector<1x8x512xf32>
    %16 = arith.maximumf %14, %15 : vector<1x8x512xf32>
    %c0_13 = arith.constant 0 : index
    %c0_14 = arith.constant 0 : index
    %c0_15 = arith.constant 0 : index
    %17 = vector.load %arg7[%c0_13, %c0_14, %c0_15] : memref<1x8x512xf32, #tpu.memory_space<vmem>>, vector<1x8x512xf32>
    tpu.vector_store %arg7[%c0_13, %c0_14, %c0_15], %16 {strides = array<i32>} : memref<1x8x512xf32, #tpu.memory_space<vmem>>, vector<1x8x512xf32>,
    return
  }
  func.func @transform_0(%arg0: i32, %arg1: i32) -> (i32, i32, i32) {
    %c0_i32 = arith.constant 0 : i32
    %c0_i32_0 = arith.constant 0 : i32
    return %arg0, %c0_i32, %arg1 : i32, i32, i32
  }
  func.func @transform_1(%arg0: i32, %arg1: i32) -> (i32, i32, i32) {
    %c0_i32 = arith.constant 0 : i32
    %c0_i32_0 = arith.constant 0 : i32
    return %arg0, %c0_i32, %arg1 : i32, i32, i32
  }
  func.func @transform_2(%arg0: i32, %arg1: i32) -> (i32, i32, i32) {
    %c0_i32 = arith.constant 0 : i32
    %c0_i32_0 = arith.constant 0 : i32
    %c0_i32_1 = arith.constant 0 : i32
    return %arg0, %c0_i32, %c0_i32_0 : i32, i32, i32
  }
  func.func @transform_3(%arg0: i32, %arg1: i32) -> (i32, i32, i32) {
    %c0_i32 = arith.constant 0 : i32
    %c0_i32_0 = arith.constant 0 : i32
    %c0_i32_1 = arith.constant 0 : i32
    return %arg0, %c0_i32, %c0_i32_0 : i32, i32, i32
  }
  func.func @transform_4(%arg0: i32, %arg1: i32) -> (i32, i32) {
    %c0_i32 = arith.constant 0 : i32
    %c0_i32_0 = arith.constant 0 : i32
    %c0_i32_1 = arith.constant 0 : i32
    return %c0_i32, %c0_i32_0 : i32, i32
  }
  func.func @transform_5(%arg0: i32, %arg1: i32) -> (i32, i32, i32) {
    %c0_i32 = arith.constant 0 : i32
    %c0_i32_0 = arith.constant 0 : i32
    return %arg0, %c0_i32, %arg1 : i32, i32, i32
  }
}

</mosaic_0001>

<llo_original>
// kernel: sssa_forward.3
$region0: #{sssa_forward.3}
  #allocation0 [shape = 'u32[]', space=smem, size = 0x4, offset = 0x4, fixed_abs, tag = 'smem constant byte address 0x4 - core index']
  #allocation1 [shape = 'u32[144,128]{1,0:T(1,128)}', space=vmem, size = 0x12000, scoped, tag = 'internal scratch']
  %s0 = inlined_call_operand.vmem [shape: bf16[2,8,1024], index: 0, kind: input, shape index: {}]
  %s1 = inlined_call_operand.vmem [shape: bf16[2,8,1024], index: 1, kind: input, shape index: {}]
  %s2 = inlined_call_operand.vmem [shape: f32[2,8,1], index: 2, kind: input, shape index: {}]
  %s3 = inlined_call_operand.vmem [shape: f32[2,8,1], index: 3, kind: input, shape index: {}]
  %s4 = inlined_call_operand.vmem [shape: f32[8,1], index: 4, kind: input, shape index: {}]
  %s5 = inlined_call_operand.vmem [shape: f32[2,8,1024], index: 5, kind: output, shape index: {}]
  %s6 = sld [smem:[#allocation0]]
  $region53: #{sssa_forward.3} parent=0
    _
  %s8 = ssub.s32 1, %s6
  %s9 = scalar_select 0, %s8, %s6
  loop: start=0, step=1, limit=6
  $region2: #{sssa_forward.3} parent=0 // loop_pre_header
    _
  $region3: #{sssa_forward.3} parent=0 // loop_header
    %s11 = sphi 0, %s15
    %p12 = scmp.ge.s32.totalorder %s11, 6
    %s18 = sphi 0, %s30
    %s19 = sphi 0, %s26
    %s20 = sphi 0, %s18
    %s21 = sphi 0, %s19
    %s22 = sphi 0, %s20
    %s23 = sphi 0, %s21
    %s35 = sphi 0, %s37
    %s38 = sphi 0, %s35
    %s39 = sphi 0, %s38
    %s55 = sphi 0, %s39
    %s63 = sphi 0, %s65
    %s66 = sphi 0, %s63
    %s67 = sphi 0, %s66
    %s83 = sphi 0, %s67
    %s89 = sphi 0, %s91
    %s92 = sphi 0, %s89
    %s93 = sphi 0, %s92
    %s109 = sphi 0, %s93
    %s115 = sphi 0, %s117
    %s118 = sphi 0, %s115
    %s119 = sphi 0, %s118
    %s135 = sphi 0, %s119
    %s139 = sphi 0, %s139
    %s141 = sphi 0, %s139
    %s142 = sphi 0, %s141
    %s156 = sphi 0, %s142
    %s164 = sphi 0, %s166
    %s167 = sphi 0, %s164
    %s168 = sphi 0, %s167
    %s184 = sphi 0, %s168
  $region4: #{sssa_forward.3} parent=0 // loop_header_branch
    %14 = sbr.rel (%p12) target = $region8
  $region5: #{sssa_forward.3} parent=0 // loop_body
    %s16 = ssub.s32 %s11, 1
    %s17 = ssub.s32 %s11, 2
    %s24 = sadd.s32 1, %s19
    %p25 = scmp.ge.s32.totalorder %s24, 2
    %s26 = scalar_select %p25, 0, %s24
    %s27 = sadd.s32 1, %s18
    %s28 = scalar_select %p25, %s27, %s18
    %p29 = scmp.ge.s32.totalorder %s28, 2
    %s30 = scalar_select %p29, 0, %s28
    %s31 = ssub.s32 %s18, %s30
    %s32 = ssub.s32 %s19, %s26
    %s33 = sor.u32 %s31, %s32
    %p34 = scmp.eq.s32.totalorder %s33, 0
    %s36 = sadd.s32 %s35, 1
    %s37 = scalar_select %p34, %s35, %s36
    %p40 = pneg %p34
    %p41 = scmp.eq.s32.totalorder %s11, 3
    %p42 = por %p40, %p41
    %p43 = scmp.ne.s32.totalorder %s35, %s38
    %p44 = scmp.eq.s32.totalorder %s11, 0
    %p45 = por %p43, %p44
    %p46 = scmp.ne.s32.totalorder %s35, %s38
    %p47 = scmp.eq.s32.totalorder %s16, 3
    %p48 = por %p46, %p47
    %p49 = scmp.ne.s32.totalorder %s38, %s39
    %p50 = scmp.eq.s32.totalorder %s16, 0
    %p51 = por %p49, %p50
    %p52 = scmp.ne.s32.totalorder %s38, %s39
    %p53 = scmp.eq.s32.totalorder %s17, 3
    %p54 = por %p52, %p53
    %p56 = scmp.ne.s32.totalorder %s39, %s55
    %p57 = scmp.eq.s32.totalorder %s17, 0
    %p58 = por %p56, %p57
    %s59 = ssub.s32 %s18, %s30
    %s60 = ssub.s32 %s19, %s26
    %s61 = sor.u32 %s59, %s60
    %p62 = scmp.eq.s32.totalorder %s61, 0
    %s64 = sadd.s32 %s63, 1
    %s65 = scalar_select %p62, %s63, %s64
    %p68 = pneg %p62
    %p69 = scmp.eq.s32.totalorder %s11, 3
    %p70 = por %p68, %p69
    %p71 = scmp.ne.s32.totalorder %s63, %s66
    %p72 = scmp.eq.s32.totalorder %s11, 0
    %p73 = por %p71, %p72
    %p74 = scmp.ne.s32.totalorder %s63, %s66
    %p75 = scmp.eq.s32.totalorder %s16, 3
    %p76 = por %p74, %p75
    %p77 = scmp.ne.s32.totalorder %s66, %s67
    %p78 = scmp.eq.s32.totalorder %s16, 0
    %p79 = por %p77, %p78
    %p80 = scmp.ne.s32.totalorder %s66, %s67
    %p81 = scmp.eq.s32.totalorder %s17, 3
    %p82 = por %p80, %p81
    %p84 = scmp.ne.s32.totalorder %s67, %s83
    %p85 = scmp.eq.s32.totalorder %s17, 0
    %p86 = por %p84, %p85
    %s87 = ssub.s32 %s18, %s30
    %p88 = scmp.eq.s32.totalorder %s87, 0
    %s90 = sadd.s32 %s89, 1
    %s91 = scalar_select %p88, %s89, %s90
    %p94 = pneg %p88
    %p95 = scmp.eq.s32.totalorder %s11, 3
    %p96 = por %p94, %p95
    %p97 = scmp.ne.s32.totalorder %s89, %s92
    %p98 = scmp.eq.s32.totalorder %s11, 0
    %p99 = por %p97, %p98
    %p100 = scmp.ne.s32.totalorder %s89, %s92
    %p101 = scmp.eq.s32.totalorder %s16, 3
    %p102 = por %p100, %p101
    %p103 = scmp.ne.s32.totalorder %s92, %s93
    %p104 = scmp.eq.s32.totalorder %s16, 0
    %p105 = por %p103, %p104
    %p106 = scmp.ne.s32.totalorder %s92, %s93
    %p107 = scmp.eq.s32.totalorder %s17, 3
    %p108 = por %p106, %p107
    %p110 = scmp.ne.s32.totalorder %s93, %s109
    %p111 = scmp.eq.s32.totalorder %s17, 0
    %p112 = por %p110, %p111
    %s113 = ssub.s32 %s18, %s30
    %p114 = scmp.eq.s32.totalorder %s113, 0
    %s116 = sadd.s32 %s115, 1
    %s117 = scalar_select %p114, %s115, %s116
    %p120 = pneg %p114
    %p121 = scmp.eq.s32.totalorder %s11, 3
    %p122 = por %p120, %p121
    %p123 = scmp.ne.s32.totalorder %s115, %s118
    %p124 = scmp.eq.s32.totalorder %s11, 0
    %p125 = por %p123, %p124
    %p126 = scmp.ne.s32.totalorder %s115, %s118
    %p127 = scmp.eq.s32.totalorder %s16, 3
    %p128 = por %p126, %p127
    %p129 = scmp.ne.s32.totalorder %s118, %s119
    %p130 = scmp.eq.s32.totalorder %s16, 0
    %p131 = por %p129, %p130
    %p132 = scmp.ne.s32.totalorder %s118, %s119
    %p133 = scmp.eq.s32.totalorder %s17, 3
    %p134 = por %p132, %p133
    %p136 = scmp.ne.s32.totalorder %s119, %s135
    %p137 = scmp.eq.s32.totalorder %s17, 0
    %p138 = por %p136, %p137
    %s140 = sadd.s32 %s139, 1
    %p143 = scmp.eq.s32.totalorder %s11, 3
    %p144 = scmp.ne.s32.totalorder %s139, %s141
    %p145 = scmp.eq.s32.totalorder %s11, 0
    %p146 = por %p144, %p145
    %p147 = scmp.ne.s32.totalorder %s139, %s141
    %p148 = scmp.eq.s32.totalorder %s16, 3
    %p149 = por %p147, %p148
    %p150 = scmp.ne.s32.totalorder %s141, %s142
    %p151 = scmp.eq.s32.totalorder %s16, 0
    %p152 = por %p150, %p151
    %p153 = scmp.ne.s32.totalorder %s141, %s142
    %p154 = scmp.eq.s32.totalorder %s17, 3
    %p155 = por %p153, %p154
    %p157 = scmp.ne.s32.totalorder %s142, %s156
    %p158 = scmp.eq.s32.totalorder %s17, 0
    %p159 = por %p157, %p158
    %s160 = ssub.s32 %s18, %s30
    %s161 = ssub.s32 %s19, %s26
    %s162 = sor.u32 %s160, %s161
    %p163 = scmp.eq.s32.totalorder %s162, 0
    %s165 = sadd.s32 %s164, 1
    %s166 = scalar_select %p163, %s164, %s165
    %p169 = pneg %p163
    %p170 = scmp.eq.s32.totalorder %s11, 3
    %p171 = por %p169, %p170
    %p172 = scmp.ne.s32.totalorder %s164, %s167
    %p173 = scmp.eq.s32.totalorder %s11, 0
    %p174 = por %p172, %p173
    %p175 = scmp.ne.s32.totalorder %s164, %s167
    %p176 = scmp.eq.s32.totalorder %s16, 3
    %p177 = por %p175, %p176
    %p178 = scmp.ne.s32.totalorder %s167, %s168
    %p179 = scmp.eq.s32.totalorder %s16, 0
    %p180 = por %p178, %p179
    %p181 = scmp.ne.s32.totalorder %s167, %s168
    %p182 = scmp.eq.s32.totalorder %s17, 3
    %p183 = por %p181, %p182
    %p185 = scmp.ne.s32.totalorder %s168, %s184
    %p186 = scmp.eq.s32.totalorder %s17, 0
    %p187 = por %p185, %p186
    %p188 = scmp.le.s32.totalorder 1, %s11
    %p189 = scmp.lt.s32.totalorder %s11, 5
    %p190 = pnand %p188, %p189
    %p191 = pneg %p190
    // Predicated region
    $region9: #{sssa_forward.3} parent=5 // pred_check
      _
    $region10: #{sssa_forward.3} parent=5 // pred_check_branch
      %193 = sbr.rel (%p190) target = $region12
    $region11: #{sssa_forward.3} parent=5 // pred_region
      %s194 = ssub.s32 %s11, 1
      // Predicated region
      $region13: #{sssa_forward.3} parent=11 // pred_check
        %p195 = pneg %p152
      $region14: #{sssa_forward.3} parent=11 // pred_check_branch
        %197 = sbr.rel (%p195) target = $region16
      $region15: #{sssa_forward.3} parent=11 // pred_region
        _
      $region16: #{sssa_forward.3} parent=11 // pred_fallthru
        _
    $region12: #{sssa_forward.3} parent=5 // pred_fallthru
      _
    %p198 = scmp.lt.s32.totalorder %s11, 4
    // Predicated region
    $region17: #{sssa_forward.3} parent=5 // pred_check
      %p199 = pneg %p198
    $region18: #{sssa_forward.3} parent=5 // pred_check_branch
      %201 = sbr.rel (%p199) target = $region20
    $region19: #{sssa_forward.3} parent=5 // pred_region
      // Predicated region
      $region21: #{sssa_forward.3} parent=19 // pred_check
        %p202 = pneg %p45
      $region22: #{sssa_forward.3} parent=19 // pred_check_branch
        %204 = sbr.rel (%p202) target = $region24
      $region23: #{sssa_forward.3} parent=19 // pred_region
        %s205 = smul.u32 4, %s19
        %p206 = scmp.lt.s32.totalorder %s18, 1
        %s207 = scalar_select %p206, %s18, 1
        %p208 = scmp.lt.s32.totalorder %s205, 7
        %s209 = scalar_select %p208, %s205, 7
        %s210 = smul.addr %s207, 8
        %s211 = sadd.s32 %s209, %s210
        %s212 = smul.addr %s211, 4
        %s213 = scalar_lea.vmem %s0, %s212
        %s214 = smul.u32 4, %s19
      $region24: #{sssa_forward.3} parent=19 // pred_fallthru
        _
      // Predicated region
      $region25: #{sssa_forward.3} parent=19 // pred_check
        %p215 = pneg %p73
      $region26: #{sssa_forward.3} parent=19 // pred_check_branch
        %217 = sbr.rel (%p215) target = $region28
      $region27: #{sssa_forward.3} parent=19 // pred_region
        %s218 = smul.u32 4, %s19
        %p219 = scmp.lt.s32.totalorder %s18, 1
        %s220 = scalar_select %p219, %s18, 1
        %p221 = scmp.lt.s32.totalorder %s218, 7
        %s222 = scalar_select %p221, %s218, 7
        %s223 = smul.addr %s220, 8
        %s224 = sadd.s32 %s222, %s223
        %s225 = smul.addr %s224, 4
        %s226 = scalar_lea.vmem %s1, %s225
        %s227 = smul.u32 4, %s19
      $region28: #{sssa_forward.3} parent=19 // pred_fallthru
        _
      // Predicated region
      $region29: #{sssa_forward.3} parent=19 // pred_check
        %p228 = pneg %p99
      $region30: #{sssa_forward.3} parent=19 // pred_check_branch
        %230 = sbr.rel (%p228) target = $region32
      $region31: #{sssa_forward.3} parent=19 // pred_region
        %p231 = scmp.lt.s32.totalorder %s18, 1
        %s232 = scalar_select %p231, %s18, 1
        %s233 = smul.addr %s232, 8
        %s234 = scalar_lea.vmem %s2, %s233
      $region32: #{sssa_forward.3} parent=19 // pred_fallthru
        _
      // Predicated region
      $region33: #{sssa_forward.3} parent=19 // pred_check
        %p235 = pneg %p125
      $region34: #{sssa_forward.3} parent=19 // pred_check_branch
        %237 = sbr.rel (%p235) target = $region36
      $region35: #{sssa_forward.3} parent=19 // pred_region
        %p238 = scmp.lt.s32.totalorder %s18, 1
        %s239 = scalar_select %p238, %s18, 1
        %s240 = smul.addr %s239, 8
        %s241 = scalar_lea.vmem %s3, %s240
      $region36: #{sssa_forward.3} parent=19 // pred_fallthru
        _
    $region20: #{sssa_forward.3} parent=5 // pred_fallthru
      _
    %p242 = scmp.le.s32.totalorder 1, %s11
    %p243 = scmp.lt.s32.totalorder %s11, 5
    %p244 = pnand %p242, %p243
    %p245 = pneg %p244
    // Predicated region
    $region37: #{sssa_forward.3} parent=5 // pred_check
      _
    $region38: #{sssa_forward.3} parent=5 // pred_check_branch
      %247 = sbr.rel (%p244) target = $region40
    $region39: #{sssa_forward.3} parent=5 // pred_region
      %s248 = ssub.s32 %s11, 1
      %s249 = smul.u32 4, %s21
      %p250 = scmp.lt.s32.totalorder %s20, 1
      %s251 = scalar_select %p250, %s20, 1
      %p252 = scmp.lt.s32.totalorder %s249, 7
      %s253 = scalar_select %p252, %s249, 7
      %s254 = smul.addr %s251, 8
      %s255 = sadd.s32 %s253, %s254
      %s256 = smul.addr %s255, 4
      %s257 = scalar_lea.vmem %s0, %s256
      %p258 = pneg %p51
      %p259 = pneg %p48
      %s260 = smul.u32 4, %s21
      %p261 = scmp.lt.s32.totalorder %s20, 1
      %s262 = scalar_select %p261, %s20, 1
      %p263 = scmp.lt.s32.totalorder %s260, 7
      %s264 = scalar_select %p263, %s260, 7
      %s265 = smul.addr %s262, 8
      %s266 = sadd.s32 %s264, %s265
      %s267 = smul.addr %s266, 4
      %s268 = scalar_lea.vmem %s1, %s267
      %p269 = pneg %p79
      %p270 = pneg %p76
      %p271 = scmp.lt.s32.totalorder %s20, 1
      %s272 = scalar_select %p271, %s20, 1
      %s273 = smul.addr %s272, 8
      %s274 = scalar_lea.vmem %s2, %s273
      %p275 = pneg %p105
      %p276 = pneg %p102
      %p277 = scmp.lt.s32.totalorder %s20, 1
      %s278 = scalar_select %p277, %s20, 1
      %s279 = smul.addr %s278, 8
      %s280 = scalar_lea.vmem %s3, %s279
      %p281 = pneg %p131
      %p282 = pneg %p128
      %p283 = pneg %p152
      %p284 = pneg %p149
      %p285 = pneg %p180
      %p286 = pneg %p177
      %s287 = smul.u32 4, %s21
      %p288 = scmp.lt.s32.totalorder %s20, 1
      %s289 = scalar_select %p288, %s20, 1
      %p290 = scmp.lt.s32.totalorder %s287, 7
      %s291 = scalar_select %p290, %s287, 7
      %s292 = smul.addr %s289, 8
      %s293 = sadd.s32 %s291, %s292
      %s294 = smul.addr %s293, 8
      %s295 = scalar_lea.vmem %s5, %s294
      %s296 = smul.u32 4, %s21
      %p297 = scmp.lt.s32.totalorder %s20, 1
      %s298 = scalar_select %p297, %s20, 1
      %p299 = scmp.lt.s32.totalorder %s296, 7
      %s300 = scalar_select %p299, %s296, 7
      %s301 = smul.addr %s298, 8
      %s302 = sadd.s32 %s300, %s301
      %s303 = smul.addr %s302, 4
      %s304 = scalar_lea.vmem %s0, %s303
      %s305 = smul.u32 4, %s21
      %s306 = smul.u32 4, %s21
      %p307 = scmp.lt.s32.totalorder %s20, 1
      %s308 = scalar_select %p307, %s20, 1
      %p309 = scmp.lt.s32.totalorder %s306, 7
      %s310 = scalar_select %p309, %s306, 7
      %s311 = smul.addr %s308, 8
      %s312 = sadd.s32 %s310, %s311
      %s313 = smul.addr %s312, 4
      %s314 = scalar_lea.vmem %s1, %s313
      %s315 = smul.u32 4, %s21
      %p316 = scmp.lt.s32.totalorder %s20, 1
      %s317 = scalar_select %p316, %s20, 1
      %s318 = smul.addr %s317, 8
      %s319 = scalar_lea.vmem %s2, %s318
      %p320 = scmp.lt.s32.totalorder %s20, 1
      %s321 = scalar_select %p320, %s20, 1
      %s322 = smul.addr %s321, 8
      %s323 = scalar_lea.vmem %s3, %s322
      %s324 = smul.u32 4, %s21
      %p325 = scmp.lt.s32.totalorder %s20, 1
      %s326 = scalar_select %p325, %s20, 1
      %p327 = scmp.lt.s32.totalorder %s324, 7
      %s328 = scalar_select %p327, %s324, 7
      %s329 = smul.addr %s326, 8
      %s330 = sadd.s32 %s328, %s329
      %s331 = smul.addr %s330, 8
      %s332 = scalar_lea.vmem %s5, %s331
      %s333 = smul.u32 4, %s21
      %v334 = vld [vmem:[%s304] sm:$0xff]
      %v335 = vld [vmem:[%s304 + $0x8] sm:$0xff]
      %v336 = vunpack.c.l.bf16 %v334
      %v337 = vunpack.c.h.bf16 %v334
      %v338 = vunpack.c.l.bf16 %v335
      %v339 = vunpack.c.h.bf16 %v335
      %v340 = vld [vmem:[%s314] sm:$0xff]
      %v341 = vld [vmem:[%s314 + $0x8] sm:$0xff]
      %v342 = vunpack.c.l.bf16 %v340
      %v343 = vunpack.c.h.bf16 %v340
      %v344 = vunpack.c.l.bf16 %v341
      %v345 = vunpack.c.h.bf16 %v341
      %v346 = vld [vmem:[%s319] sm:$0xff]
      %348 = vset.pattern.permute.xlu0 0
      %349 = vperm.xlu0 %348, %v346
      %v350 = vpop.permute.xlu0 %349
      %v352 = vmul.f32 %v336, %v350
      %v353 = vmul.f32 %v337, %v350
      %v354 = vmul.f32 %v338, %v350
      %v355 = vmul.f32 %v339, %v350
      %v356 = vld [vmem:[%s323] sm:$0xff]
      %358 = vset.pattern.permute.xlu0 0
      %359 = vperm.xlu0 %358, %v356
      %v360 = vpop.permute.xlu0 %359
      %v362 = vmul.f32 %v342, %v360
      %v363 = vmul.f32 %v343, %v360
      %v364 = vmul.f32 %v344, %v360
      %v365 = vmul.f32 %v345, %v360
      %v366 = vadd.f32 %v352, %v362
      %v367 = vadd.f32 %v353, %v363
      %v368 = vadd.f32 %v354, %v364
      %v369 = vadd.f32 %v355, %v365
      %v370 = vld [vmem:[%s4] sm:$0xff]
      %372 = vset.pattern.permute.xlu0 0
      %373 = vperm.xlu0 %372, %v370
      %v374 = vpop.permute.xlu0 %373
      %v376 = vadd.f32 %v366, %v374
      %v377 = vadd.f32 %v367, %v374
      %v378 = vadd.f32 %v368, %v374
      %v379 = vadd.f32 %v369, %v374
      %v380 = vmax.f32 %v376, 0.0
      %v381 = vmax.f32 %v377, 0.0
      %v382 = vmax.f32 %v378, 0.0
      %v383 = vmax.f32 %v379, 0.0
      %384 = vst [vmem:[%s332] sm:$0xff] %v380
      %385 = vst [vmem:[%s332 + $0x8] sm:$0xff] %v381
      %386 = vst [vmem:[%s332 + $0x10] sm:$0xff] %v382
      %387 = vst [vmem:[%s332 + $0x18] sm:$0xff] %v383
      %s388 = smul.u32 4, %s21
      %p389 = scmp.lt.s32.totalorder %s20, 1
      %s390 = scalar_select %p389, %s20, 1
      %p391 = scmp.lt.s32.totalorder %s388, 7
      %s392 = scalar_select %p391, %s388, 7
      %s393 = smul.addr %s390, 8
      %s394 = sadd.s32 %s392, %s393
      %s395 = smul.addr %s394, 8
      %s396 = scalar_lea.vmem %s5, %s395
      // Predicated region
      $region41: #{sssa_forward.3} parent=39 // pred_check
        %p397 = pneg %p177
      $region42: #{sssa_forward.3} parent=39 // pred_check_branch
        %399 = sbr.rel (%p397) target = $region44
      $region43: #{sssa_forward.3} parent=39 // pred_region
        %s400 = smul.u32 4, %s21
      $region44: #{sssa_forward.3} parent=39 // pred_fallthru
        _
    $region40: #{sssa_forward.3} parent=5 // pred_fallthru
      _
    %p401 = scmp.le.s32.totalorder 2, %s11
    // Predicated region
    $region45: #{sssa_forward.3} parent=5 // pred_check
      %p402 = pneg %p401
    $region46: #{sssa_forward.3} parent=5 // pred_check_branch
      %404 = sbr.rel (%p402) target = $region48
    $region47: #{sssa_forward.3} parent=5 // pred_region
      %s405 = ssub.s32 %s11, 2
      // Predicated region
      $region49: #{sssa_forward.3} parent=47 // pred_check
        %p406 = pneg %p183
      $region50: #{sssa_forward.3} parent=47 // pred_check_branch
        %408 = sbr.rel (%p406) target = $region52
      $region51: #{sssa_forward.3} parent=47 // pred_region
        %s409 = smul.u32 4, %s23
        %p410 = scmp.lt.s32.totalorder %s22, 1
        %s411 = scalar_select %p410, %s22, 1
        %p412 = scmp.lt.s32.totalorder %s409, 7
        %s413 = scalar_select %p412, %s409, 7
        %s414 = smul.addr %s411, 8
        %s415 = sadd.s32 %s413, %s414
        %s416 = smul.addr %s415, 8
        %s417 = scalar_lea.vmem %s5, %s416
      $region52: #{sssa_forward.3} parent=47 // pred_fallthru
        _
    $region48: #{sssa_forward.3} parent=5 // pred_fallthru
      _
  $region6: #{sssa_forward.3} parent=0 // loop_footer
    %s15 = sadd.s32 1, %s11
  $region7: #{sssa_forward.3} parent=0 // loop_footer_branch
    %10 = sbr.rel target = $region3
  $region8: #{sssa_forward.3} parent=0 // loop_exit
    _

// kernel: sssa_forward.2
$region0: #{sssa_forward.2}
  #allocation0 [shape = 'u32[]', space=smem, size = 0x4, offset = 0x4, fixed_abs, tag = 'smem constant byte address 0x4 - core index']
  #allocation1 [shape = 'u32[144,128]{1,0:T(1,128)}', space=vmem, size = 0x12000, scoped, tag = 'internal scratch']
  %s0 = inlined_call_operand.vmem [shape: f32[2,36,1024], index: 0, kind: input, shape index: {}]
  %s1 = inlined_call_operand.vmem [shape: f32[8,36], index: 1, kind: input, shape index: {}]
  %s2 = inlined_call_operand.vmem [shape: f32[8,24], index: 2, kind: input, shape index: {}]
  %s3 = inlined_call_operand.vmem [shape: bf16[2,8,1024], index: 3, kind: output, shape index: {0}]
  %s4 = inlined_call_operand.vmem [shape: bf16[2,8,1024], index: 4, kind: output, shape index: {1}]
  %s5 = inlined_call_operand.vmem [shape: f32[2,8,5], index: 5, kind: output, shape index: {2}]
  %6 = xla_tuple %s3, %s4, %s5
  %s7 = sld [smem:[#allocation0]]
  $region61: #{sssa_forward.2} parent=0
    _
  %s9 = ssub.s32 1, %s7
  %s10 = scalar_select 0, %s9, %s7
  loop: start=0, step=1, limit=4
  $region2: #{sssa_forward.2} parent=0 // loop_pre_header
    _
  $region3: #{sssa_forward.2} parent=0 // loop_header
    %s12 = sphi 0, %s16
    %p13 = scmp.ge.s32.totalorder %s12, 4
    %s22 = sphi 0, %s24
    %s25 = sphi 0, %s22
    %s26 = sphi 0, %s25
    %s42 = sphi 0, %s26
    %s46 = sphi 0, %s46
    %s48 = sphi 0, %s46
    %s49 = sphi 0, %s48
    %s63 = sphi 0, %s49
    %s67 = sphi 0, %s67
    %s69 = sphi 0, %s67
    %s70 = sphi 0, %s69
    %s84 = sphi 0, %s70
    %s90 = sphi 0, %s92
    %s93 = sphi 0, %s90
    %s94 = sphi 0, %s93
    %s110 = sphi 0, %s94
    %s116 = sphi 0, %s118
    %s119 = sphi 0, %s116
    %s120 = sphi 0, %s119
    %s136 = sphi 0, %s120
    %s142 = sphi 0, %s144
    %s145 = sphi 0, %s142
    %s146 = sphi 0, %s145
    %s162 = sphi 0, %s146
  $region4: #{sssa_forward.2} parent=0 // loop_header_branch
    %15 = sbr.rel (%p13) target = $region8
  $region5: #{sssa_forward.2} parent=0 // loop_body
    %s17 = ssub.s32 %s12, 1
    %s18 = ssub.s32 %s12, 2
    %s19 = sadd.s32 %s12, 1
    %s20 = ssub.s32 %s12, %s19
    %p21 = scmp.eq.s32.totalorder %s20, 0
    %s23 = sadd.s32 %s22, 1
    %s24 = scalar_select %p21, %s22, %s23
    %p27 = pneg %p21
    %p28 = scmp.eq.s32.totalorder %s12, 1
    %p29 = por %p27, %p28
    %p30 = scmp.ne.s32.totalorder %s22, %s25
    %p31 = scmp.eq.s32.totalorder %s12, 0
    %p32 = por %p30, %p31
    %p33 = scmp.ne.s32.totalorder %s22, %s25
    %p34 = scmp.eq.s32.totalorder %s17, 1
    %p35 = por %p33, %p34
    %p36 = scmp.ne.s32.totalorder %s25, %s26
    %p37 = scmp.eq.s32.totalorder %s17, 0
    %p38 = por %p36, %p37
    %p39 = scmp.ne.s32.totalorder %s25, %s26
    %p40 = scmp.eq.s32.totalorder %s18, 1
    %p41 = por %p39, %p40
    %p43 = scmp.ne.s32.totalorder %s26, %s42
    %p44 = scmp.eq.s32.totalorder %s18, 0
    %p45 = por %p43, %p44
    %s47 = sadd.s32 %s46, 1
    %p50 = scmp.eq.s32.totalorder %s12, 1
    %p51 = scmp.ne.s32.totalorder %s46, %s48
    %p52 = scmp.eq.s32.totalorder %s12, 0
    %p53 = por %p51, %p52
    %p54 = scmp.ne.s32.totalorder %s46, %s48
    %p55 = scmp.eq.s32.totalorder %s17, 1
    %p56 = por %p54, %p55
    %p57 = scmp.ne.s32.totalorder %s48, %s49
    %p58 = scmp.eq.s32.totalorder %s17, 0
    %p59 = por %p57, %p58
    %p60 = scmp.ne.s32.totalorder %s48, %s49
    %p61 = scmp.eq.s32.totalorder %s18, 1
    %p62 = por %p60, %p61
    %p64 = scmp.ne.s32.totalorder %s49, %s63
    %p65 = scmp.eq.s32.totalorder %s18, 0
    %p66 = por %p64, %p65
    %s68 = sadd.s32 %s67, 1
    %p71 = scmp.eq.s32.totalorder %s12, 1
    %p72 = scmp.ne.s32.totalorder %s67, %s69
    %p73 = scmp.eq.s32.totalorder %s12, 0
    %p74 = por %p72, %p73
    %p75 = scmp.ne.s32.totalorder %s67, %s69
    %p76 = scmp.eq.s32.totalorder %s17, 1
    %p77 = por %p75, %p76
    %p78 = scmp.ne.s32.totalorder %s69, %s70
    %p79 = scmp.eq.s32.totalorder %s17, 0
    %p80 = por %p78, %p79
    %p81 = scmp.ne.s32.totalorder %s69, %s70
    %p82 = scmp.eq.s32.totalorder %s18, 1
    %p83 = por %p81, %p82
    %p85 = scmp.ne.s32.totalorder %s70, %s84
    %p86 = scmp.eq.s32.totalorder %s18, 0
    %p87 = por %p85, %p86
    %s88 = ssub.s32 %s12, %s19
    %p89 = scmp.eq.s32.totalorder %s88, 0
    %s91 = sadd.s32 %s90, 1
    %s92 = scalar_select %p89, %s90, %s91
    %p95 = pneg %p89
    %p96 = scmp.eq.s32.totalorder %s12, 1
    %p97 = por %p95, %p96
    %p98 = scmp.ne.s32.totalorder %s90, %s93
    %p99 = scmp.eq.s32.totalorder %s12, 0
    %p100 = por %p98, %p99
    %p101 = scmp.ne.s32.totalorder %s90, %s93
    %p102 = scmp.eq.s32.totalorder %s17, 1
    %p103 = por %p101, %p102
    %p104 = scmp.ne.s32.totalorder %s93, %s94
    %p105 = scmp.eq.s32.totalorder %s17, 0
    %p106 = por %p104, %p105
    %p107 = scmp.ne.s32.totalorder %s93, %s94
    %p108 = scmp.eq.s32.totalorder %s18, 1
    %p109 = por %p107, %p108
    %p111 = scmp.ne.s32.totalorder %s94, %s110
    %p112 = scmp.eq.s32.totalorder %s18, 0
    %p113 = por %p111, %p112
    %s114 = ssub.s32 %s12, %s19
    %p115 = scmp.eq.s32.totalorder %s114, 0
    %s117 = sadd.s32 %s116, 1
    %s118 = scalar_select %p115, %s116, %s117
    %p121 = pneg %p115
    %p122 = scmp.eq.s32.totalorder %s12, 1
    %p123 = por %p121, %p122
    %p124 = scmp.ne.s32.totalorder %s116, %s119
    %p125 = scmp.eq.s32.totalorder %s12, 0
    %p126 = por %p124, %p125
    %p127 = scmp.ne.s32.totalorder %s116, %s119
    %p128 = scmp.eq.s32.totalorder %s17, 1
    %p129 = por %p127, %p128
    %p130 = scmp.ne.s32.totalorder %s119, %s120
    %p131 = scmp.eq.s32.totalorder %s17, 0
    %p132 = por %p130, %p131
    %p133 = scmp.ne.s32.totalorder %s119, %s120
    %p134 = scmp.eq.s32.totalorder %s18, 1
    %p135 = por %p133, %p134
    %p137 = scmp.ne.s32.totalorder %s120, %s136
    %p138 = scmp.eq.s32.totalorder %s18, 0
    %p139 = por %p137, %p138
    %s140 = ssub.s32 %s12, %s19
    %p141 = scmp.eq.s32.totalorder %s140, 0
    %s143 = sadd.s32 %s142, 1
    %s144 = scalar_select %p141, %s142, %s143
    %p147 = pneg %p141
    %p148 = scmp.eq.s32.totalorder %s12, 1
    %p149 = por %p147, %p148
    %p150 = scmp.ne.s32.totalorder %s142, %s145
    %p151 = scmp.eq.s32.totalorder %s12, 0
    %p152 = por %p150, %p151
    %p153 = scmp.ne.s32.totalorder %s142, %s145
    %p154 = scmp.eq.s32.totalorder %s17, 1
    %p155 = por %p153, %p154
    %p156 = scmp.ne.s32.totalorder %s145, %s146
    %p157 = scmp.eq.s32.totalorder %s17, 0
    %p158 = por %p156, %p157
    %p159 = scmp.ne.s32.totalorder %s145, %s146
    %p160 = scmp.eq.s32.totalorder %s18, 1
    %p161 = por %p159, %p160
    %p163 = scmp.ne.s32.totalorder %s146, %s162
    %p164 = scmp.eq.s32.totalorder %s18, 0
    %p165 = por %p163, %p164
    %p166 = scmp.le.s32.totalorder 1, %s12
    %p167 = scmp.lt.s32.totalorder %s12, 3
    %p168 = pnand %p166, %p167
    %p169 = pneg %p168
    // Predicated region
    $region9: #{sssa_forward.2} parent=5 // pred_check
      _
    $region10: #{sssa_forward.2} parent=5 // pred_check_branch
      %171 = sbr.rel (%p168) target = $region12
    $region11: #{sssa_forward.2} parent=5 // pred_region
      %s172 = ssub.s32 %s12, 1
      // Predicated region
      $region13: #{sssa_forward.2} parent=11 // pred_check
        %p173 = pneg %p59
      $region14: #{sssa_forward.2} parent=11 // pred_check_branch
        %175 = sbr.rel (%p173) target = $region16
      $region15: #{sssa_forward.2} parent=11 // pred_region
        _
      $region16: #{sssa_forward.2} parent=11 // pred_fallthru
        _
      // Predicated region
      $region17: #{sssa_forward.2} parent=11 // pred_check
        %p176 = pneg %p80
      $region18: #{sssa_forward.2} parent=11 // pred_check_branch
        %178 = sbr.rel (%p176) target = $region20
      $region19: #{sssa_forward.2} parent=11 // pred_region
        _
      $region20: #{sssa_forward.2} parent=11 // pred_fallthru
        _
    $region12: #{sssa_forward.2} parent=5 // pred_fallthru
      _
    %p179 = scmp.lt.s32.totalorder %s12, 2
    // Predicated region
    $region21: #{sssa_forward.2} parent=5 // pred_check
      %p180 = pneg %p179
    $region22: #{sssa_forward.2} parent=5 // pred_check_branch
      %182 = sbr.rel (%p180) target = $region24
    $region23: #{sssa_forward.2} parent=5 // pred_region
      // Predicated region
      $region25: #{sssa_forward.2} parent=23 // pred_check
        %p183 = pneg %p32
      $region26: #{sssa_forward.2} parent=23 // pred_check_branch
        %185 = sbr.rel (%p183) target = $region28
      $region27: #{sssa_forward.2} parent=23 // pred_region
        %p186 = scmp.lt.s32.totalorder %s12, 1
        %s187 = scalar_select %p186, %s12, 1
        %s188 = smul.addr %s187, 40
        %s189 = smul.addr %s188, 8
        %s190 = scalar_lea.vmem %s0, %s189
      $region28: #{sssa_forward.2} parent=23 // pred_fallthru
        _
    $region24: #{sssa_forward.2} parent=5 // pred_fallthru
      _
    %p191 = scmp.le.s32.totalorder 1, %s12
    %p192 = scmp.lt.s32.totalorder %s12, 3
    %p193 = pnand %p191, %p192
    %p194 = pneg %p193
    // Predicated region
    $region29: #{sssa_forward.2} parent=5 // pred_check
      _
    $region30: #{sssa_forward.2} parent=5 // pred_check_branch
      %196 = sbr.rel (%p193) target = $region32
    $region31: #{sssa_forward.2} parent=5 // pred_region
      %s197 = ssub.s32 %s12, 1
      %p198 = scmp.lt.s32.totalorder %s17, 1
      %s199 = scalar_select %p198, %s17, 1
      %s200 = smul.addr %s199, 40
      %s201 = smul.addr %s200, 8
      %s202 = scalar_lea.vmem %s0, %s201
      %p203 = pneg %p38
      %p204 = pneg %p35
      %p205 = pneg %p59
      %p206 = pneg %p56
      %p207 = pneg %p80
      %p208 = pneg %p77
      %p209 = pneg %p106
      %p210 = pneg %p103
      %p211 = scmp.lt.s32.totalorder %s17, 1
      %s212 = scalar_select %p211, %s17, 1
      %s213 = smul.addr %s212, 8
      %s214 = smul.addr %s213, 4
      %s215 = scalar_lea.vmem %s3, %s214
      %p216 = pneg %p132
      %p217 = pneg %p129
      %p218 = scmp.lt.s32.totalorder %s17, 1
      %s219 = scalar_select %p218, %s17, 1
      %s220 = smul.addr %s219, 8
      %s221 = smul.addr %s220, 4
      %s222 = scalar_lea.vmem %s4, %s221
      %p223 = pneg %p158
      %p224 = pneg %p155
      %p225 = scmp.lt.s32.totalorder %s17, 1
      %s226 = scalar_select %p225, %s17, 1
      %s227 = smul.addr %s226, 8
      %s228 = scalar_lea.vmem %s5, %s227
      %p229 = scmp.lt.s32.totalorder %s17, 1
      %s230 = scalar_select %p229, %s17, 1
      %s231 = smul.addr %s230, 40
      %s232 = smul.addr %s231, 8
      %s233 = scalar_lea.vmem %s0, %s232
      %p234 = scmp.lt.s32.totalorder %s17, 1
      %s235 = scalar_select %p234, %s17, 1
      %s236 = smul.addr %s235, 8
      %s237 = smul.addr %s236, 4
      %s238 = scalar_lea.vmem %s3, %s237
      %p239 = scmp.lt.s32.totalorder %s17, 1
      %s240 = scalar_select %p239, %s17, 1
      %s241 = smul.addr %s240, 8
      %s242 = smul.addr %s241, 4
      %s243 = scalar_lea.vmem %s4, %s242
      %p244 = scmp.lt.s32.totalorder %s17, 1
      %s245 = scalar_select %p244, %s17, 1
      %s246 = smul.addr %s245, 8
      %s247 = scalar_lea.vmem %s5, %s246
      %v248 = vld [vmem:[%s1] sm:$0xff]
      %v249 = vld [vmem:[%s233] sm:$0xff]
      %v250 = vld [vmem:[%s233 + $0x8] sm:$0xff]
      %v251 = vld [vmem:[%s233 + $0x10] sm:$0xff]
      %v252 = vld [vmem:[%s233 + $0x18] sm:$0xff]
      %v253 = vld [vmem:[%s233 + $0x20] sm:$0xff]
      %v254 = vld [vmem:[%s233 + $0x28] sm:$0xff]
      %v255 = vld [vmem:[%s233 + $0x30] sm:$0xff]
      %v256 = vld [vmem:[%s233 + $0x38] sm:$0xff]
      %v257 = vld [vmem:[%s233 + $0x40] sm:$0xff]
      %v258 = vld [vmem:[%s233 + $0x48] sm:$0xff]
      %v259 = vld [vmem:[%s233 + $0x50] sm:$0xff]
      %v260 = vld [vmem:[%s233 + $0x58] sm:$0xff]
      %v261 = vld [vmem:[%s233 + $0x60] sm:$0xff]
      %v262 = vld [vmem:[%s233 + $0x68] sm:$0xff]
      %v263 = vld [vmem:[%s233 + $0x70] sm:$0xff]
      %v264 = vld [vmem:[%s233 + $0x78] sm:$0xff]
      %v265 = vld [vmem:[%s233 + $0x80] sm:$0xff]
      %v266 = vld [vmem:[%s233 + $0x88] sm:$0xff]
      %v267 = vld [vmem:[%s233 + $0x90] sm:$0xff]
      %v268 = vld [vmem:[%s233 + $0x98] sm:$0xff]
      %v269 = vld [vmem:[%s233 + $0xa0] sm:$0xff]
      %v270 = vld [vmem:[%s233 + $0xa8] sm:$0xff]
      %v271 = vld [vmem:[%s233 + $0xb0] sm:$0xff]
      %v272 = vld [vmem:[%s233 + $0xb8] sm:$0xff]
      %v273 = vld [vmem:[%s233 + $0xc0] sm:$0xff]
      %v274 = vld [vmem:[%s233 + $0xc8] sm:$0xff]
      %v275 = vld [vmem:[%s233 + $0xd0] sm:$0xff]
      %v276 = vld [vmem:[%s233 + $0xd8] sm:$0xff]
      %v277 = vld [vmem:[%s233 + $0xe0] sm:$0xff]
      %v278 = vld [vmem:[%s233 + $0xe8] sm:$0xff]
      %v279 = vld [vmem:[%s233 + $0xf0] sm:$0xff]
      %v280 = vld [vmem:[%s233 + $0xf8] sm:$0xff]
      %v281 = vld [vmem:[%s233 + $0x100] sm:$0xf]
      %v282 = vld [vmem:[%s233 + $0x108] sm:$0xf]
      %v283 = vld [vmem:[%s233 + $0x110] sm:$0xf]
      %v284 = vld [vmem:[%s233 + $0x118] sm:$0xf]
      %v285 = vld [vmem:[%s233 + $0x120] sm:$0xf]
      %v286 = vld [vmem:[%s233 + $0x128] sm:$0xf]
      %v287 = vld [vmem:[%s233 + $0x130] sm:$0xf]
      %v288 = vld [vmem:[%s233 + $0x138] sm:$0xf]
      %vm289 = vcmask 293888
      %v291 = vsel %vm289, %v248, 0
      %vm293 = vcmask 1043456
      %v295 = vsel %vm293, %v281, 0
      %v298 = vsel %vm293, %v282, 0
      %v301 = vsel %vm293, %v283, 0
      %v304 = vsel %vm293, %v284, 0
      %v307 = vsel %vm293, %v285, 0
      %v310 = vsel %vm293, %v286, 0
      %v313 = vsel %vm293, %v287, 0
      %v316 = vsel %vm293, %v288, 0
      %318 = vmatprep.subr.mxu0 %v250
      %319 = vmatpush1.msra.mxu0 %v249
      %320 = vmatprep.subr.mxu0 %v258
      %321 = vmatpush1.msra.mxu0 %v257
      %322 = vmatprep.subr.mxu0 %v266
      %323 = vmatpush1.msra.mxu0 %v265
      %324 = vmatprep.subr.mxu0 %v274
      %325 = vmatpush1.msra.mxu0 %v273
      %326 = vmatprep.subr.mxu0 %v298
      %327 = vmatpush1.msra.mxu0 %v295
      %328 = vmatprep.subr.mxu0 0.0
      %329 = vmatpush1.msra.mxu0 0.0
      %330 = vmatprep.subr.mxu0 0.0
      %331 = vmatpush1.msra.mxu0 0.0
      %332 = vmatprep.subr.mxu0 0.0
      %333 = vmatpush1.msra.mxu0 0.0
      %334 = vmatprep.subr.mxu0 0.0
      %335 = vmatpush1.msra.mxu0 0.0
      %336 = vmatprep.subr.mxu0 0.0
      %337 = vmatpush1.msra.mxu0 0.0
      %338 = vmatprep.subr.mxu0 0.0
      %339 = vmatpush1.msra.mxu0 0.0
      %340 = vmatprep.subr.mxu0 0.0
      %341 = vmatpush1.msra.mxu0 0.0
      %342 = vmatprep.subr.mxu0 0.0
      %343 = vmatpush1.msra.mxu0 0.0
      %344 = vmatprep.subr.mxu0 0.0
      %345 = vmatpush1.msra.mxu0 0.0
      %346 = vmatprep.subr.mxu0 0.0
      %347 = vmatpush1.msra.mxu0 0.0
      %348 = vmatprep.subr.mxu0 0.0
      %349 = vmatpush1.msra.mxu0 0.0
      %350 = vmatprep.subr.mxu0 0.0
      %351 = vmatpush1.msra.mxu0 0.0
      %352 = vmatprep.subr.mxu0 0.0
      %353 = vmatpush1.msra.mxu0 0.0
      %354 = vmatprep.subr.mxu0 0.0
      %355 = vmatpush1.msra.mxu0 0.0
      %356 = vmatprep.subr.mxu0 0.0
      %357 = vmatpush1.msra.mxu0 0.0
      %358 = vmatprep.subr.mxu0 0.0
      %359 = vmatpush1.msra.mxu0 0.0
      %360 = vmatprep.subr.mxu0 0.0
      %361 = vmatpush1.msra.mxu0 0.0
      %362 = vmatprep.subr.mxu0 0.0
      %363 = vmatpush1.msra.mxu0 0.0
      %364 = vmatprep.subr.mxu0 0.0
      %365 = vmatpush1.msra.mxu0 0.0
      %366 = vmatprep.subr.mxu0 0.0
      %367 = vmatpush1.msra.mxu0 0.0
      %368 = vmatprep.subr.mxu0 0.0
      %369 = vmatpush1.msra.mxu0 0.0
      %370 = vmatprep.subr.mxu0 0.0
      %371 = vmatpush1.msra.mxu0 0.0
      %372 = vmatprep.subr.mxu0 0.0
      %373 = vmatpush1.msra.mxu0 0.0
      %374 = vmatprep.subr.mxu0 0.0
      %375 = vmatpush1.msra.mxu0 0.0
      %376 = vmatprep.subr.mxu0 0.0
      %377 = vmatpush1.msra.mxu0 0.0
      %378 = vmatprep.subr.mxu0 0.0
      %379 = vmatpush1.msra.mxu0 0.0
      %380 = vmatprep.subr.mxu0 0.0
      %381 = vmatpush1.msra.mxu0 0.0
      %382 = vmatprep.mubr.f32.mxu0 0.0
      %383 = vmatmul.mubr.f32.gmra.mrb[0].mxu0 %v291
      %v384 = vpop.f32.mrb[0].mxu0
      %v385 = vadd.f32 0.0, %v384
      %v386 = vpop.f32.mrb[0].mxu0
      %v387 = vadd.f32 0.0, %v386
      %388 = vdwg.mxu0
      %389 = vmatprep.subr.mxu0 %v252
      %390 = vmatpush1.msra.mxu0 %v251
      %391 = vmatprep.subr.mxu0 %v260
      %392 = vmatpush1.msra.mxu0 %v259
      %393 = vmatprep.subr.mxu0 %v268
      %394 = vmatpush1.msra.mxu0 %v267
      %395 = vmatprep.subr.mxu0 %v276
      %396 = vmatpush1.msra.mxu0 %v275
      %397 = vmatprep.subr.mxu0 %v304
      %398 = vmatpush1.msra.mxu0 %v301
      %399 = vmatprep.subr.mxu0 0.0
      %400 = vmatpush1.msra.mxu0 0.0
      %401 = vmatprep.subr.mxu0 0.0
      %402 = vmatpush1.msra.mxu0 0.0
      %403 = vmatprep.subr.mxu0 0.0
      %404 = vmatpush1.msra.mxu0 0.0
      %405 = vmatprep.subr.mxu0 0.0
      %406 = vmatpush1.msra.mxu0 0.0
      %407 = vmatprep.subr.mxu0 0.0
      %408 = vmatpush1.msra.mxu0 0.0
      %409 = vmatprep.subr.mxu0 0.0
      %410 = vmatpush1.msra.mxu0 0.0
      %411 = vmatprep.subr.mxu0 0.0
      %412 = vmatpush1.msra.mxu0 0.0
      %413 = vmatprep.subr.mxu0 0.0
      %414 = vmatpush1.msra.mxu0 0.0
      %415 = vmatprep.subr.mxu0 0.0
      %416 = vmatpush1.msra.mxu0 0.0
      %417 = vmatprep.subr.mxu0 0.0
      %418 = vmatpush1.msra.mxu0 0.0
      %419 = vmatprep.subr.mxu0 0.0
      %420 = vmatpush1.msra.mxu0 0.0
      %421 = vmatprep.subr.mxu0 0.0
      %422 = vmatpush1.msra.mxu0 0.0
      %423 = vmatprep.subr.mxu0 0.0
      %424 = vmatpush1.msra.mxu0 0.0
      %425 = vmatprep.subr.mxu0 0.0
      %426 = vmatpush1.msra.mxu0 0.0
      %427 = vmatprep.subr.mxu0 0.0
      %428 = vmatpush1.msra.mxu0 0.0
      %429 = vmatprep.subr.mxu0 0.0
      %430 = vmatpush1.msra.mxu0 0.0
      %431 = vmatprep.subr.mxu0 0.0
      %432 = vmatpush1.msra.mxu0 0.0
      %433 = vmatprep.subr.mxu0 0.0
      %434 = vmatpush1.msra.mxu0 0.0
      %435 = vmatprep.subr.mxu0 0.0
      %436 = vmatpush1.msra.mxu0 0.0
      %437 = vmatprep.subr.mxu0 0.0
      %438 = vmatpush1.msra.mxu0 0.0
      %439 = vmatprep.subr.mxu0 0.0
      %440 = vmatpush1.msra.mxu0 0.0
      %441 = vmatprep.subr.mxu0 0.0
      %442 = vmatpush1.msra.mxu0 0.0
      %443 = vmatprep.subr.mxu0 0.0
      %444 = vmatpush1.msra.mxu0 0.0
      %445 = vmatprep.subr.mxu0 0.0
      %446 = vmatpush1.msra.mxu0 0.0
      %447 = vmatprep.subr.mxu0 0.0
      %448 = vmatpush1.msra.mxu0 0.0
      %449 = vmatprep.subr.mxu0 0.0
      %450 = vmatpush1.msra.mxu0 0.0
      %451 = vmatprep.subr.mxu0 0.0
      %452 = vmatpush1.msra.mxu0 0.0
      %453 = vmatprep.mubr.f32.mxu0 0.0
      %454 = vmatmul.mubr.f32.gmra.mrb[0].mxu0 %v291
      %v455 = vpop.f32.mrb[0].mxu0
      %v456 = vadd.f32 0.0, %v455
      %v457 = vpop.f32.mrb[0].mxu0
      %v458 = vadd.f32 0.0, %v457
      %459 = vdwg.mxu0
      %460 = vmatprep.subr.mxu0 %v254
      %461 = vmatpush1.msra.mxu0 %v253
      %462 = vmatprep.subr.mxu0 %v262
      %463 = vmatpush1.msra.mxu0 %v261
      %464 = vmatprep.subr.mxu0 %v270
      %465 = vmatpush1.msra.mxu0 %v269
      %466 = vmatprep.subr.mxu0 %v278
      %467 = vmatpush1.msra.mxu0 %v277
      %468 = vmatprep.subr.mxu0 %v310
      %469 = vmatpush1.msra.mxu0 %v307
      %470 = vmatprep.subr.mxu0 0.0
      %471 = vmatpush1.msra.mxu0 0.0
      %472 = vmatprep.subr.mxu0 0.0
      %473 = vmatpush1.msra.mxu0 0.0
      %474 = vmatprep.subr.mxu0 0.0
      %475 = vmatpush1.msra.mxu0 0.0
      %476 = vmatprep.subr.mxu0 0.0
      %477 = vmatpush1.msra.mxu0 0.0
      %478 = vmatprep.subr.mxu0 0.0
      %479 = vmatpush1.msra.mxu0 0.0
      %480 = vmatprep.subr.mxu0 0.0
      %481 = vmatpush1.msra.mxu0 0.0
      %482 = vmatprep.subr.mxu0 0.0
      %483 = vmatpush1.msra.mxu0 0.0
      %484 = vmatprep.subr.mxu0 0.0
      %485 = vmatpush1.msra.mxu0 0.0
      %486 = vmatprep.subr.mxu0 0.0
      %487 = vmatpush1.msra.mxu0 0.0
      %488 = vmatprep.subr.mxu0 0.0
      %489 = vmatpush1.msra.mxu0 0.0
      %490 = vmatprep.subr.mxu0 0.0
      %491 = vmatpush1.msra.mxu0 0.0
      %492 = vmatprep.subr.mxu0 0.0
      %493 = vmatpush1.msra.mxu0 0.0
      %494 = vmatprep.subr.mxu0 0.0
      %495 = vmatpush1.msra.mxu0 0.0
      %496 = vmatprep.subr.mxu0 0.0
      %497 = vmatpush1.msra.mxu0 0.0
      %498 = vmatprep.subr.mxu0 0.0
      %499 = vmatpush1.msra.mxu0 0.0
      %500 = vmatprep.subr.mxu0 0.0
      %501 = vmatpush1.msra.mxu0 0.0
      %502 = vmatprep.subr.mxu0 0.0
      %503 = vmatpush1.msra.mxu0 0.0
      %504 = vmatprep.subr.mxu0 0.0
      %505 = vmatpush1.msra.mxu0 0.0
      %506 = vmatprep.subr.mxu0 0.0
      %507 = vmatpush1.msra.mxu0 0.0
      %508 = vmatprep.subr.mxu0 0.0
      %509 = vmatpush1.msra.mxu0 0.0
      %510 = vmatprep.subr.mxu0 0.0
      %511 = vmatpush1.msra.mxu0 0.0
      %512 = vmatprep.subr.mxu0 0.0
      %513 = vmatpush1.msra.mxu0 0.0
      %514 = vmatprep.subr.mxu0 0.0
      %515 = vmatpush1.msra.mxu0 0.0
      %516 = vmatprep.subr.mxu0 0.0
      %517 = vmatpush1.msra.mxu0 0.0
      %518 = vmatprep.subr.mxu0 0.0
      %519 = vmatpush1.msra.mxu0 0.0
      %520 = vmatprep.subr.mxu0 0.0
      %521 = vmatpush1.msra.mxu0 0.0
      %522 = vmatprep.subr.mxu0 0.0
      %523 = vmatpush1.msra.mxu0 0.0
      %524 = vmatprep.mubr.f32.mxu0 0.0
      %525 = vmatmul.mubr.f32.gmra.mrb[0].mxu0 %v291
      %v526 = vpop.f32.mrb[0].mxu0
      %v527 = vadd.f32 0.0, %v526
      %v528 = vpop.f32.mrb[0].mxu0
      %v529 = vadd.f32 0.0, %v528
      %530 = vdwg.mxu0
      %531 = vmatprep.subr.mxu0 %v256
      %532 = vmatpush1.msra.mxu0 %v255
      %533 = vmatprep.subr.mxu0 %v264
      %534 = vmatpush1.msra.mxu0 %v263
      %535 = vmatprep.subr.mxu0 %v272
      %536 = vmatpush1.msra.mxu0 %v271
      %537 = vmatprep.subr.mxu0 %v280
      %538 = vmatpush1.msra.mxu0 %v279
      %539 = vmatprep.subr.mxu0 %v316
      %540 = vmatpush1.msra.mxu0 %v313
      %541 = vmatprep.subr.mxu0 0.0
      %542 = vmatpush1.msra.mxu0 0.0
      %543 = vmatprep.subr.mxu0 0.0
      %544 = vmatpush1.msra.mxu0 0.0
      %545 = vmatprep.subr.mxu0 0.0
      %546 = vmatpush1.msra.mxu0 0.0
      %547 = vmatprep.subr.mxu0 0.0
      %548 = vmatpush1.msra.mxu0 0.0
      %549 = vmatprep.subr.mxu0 0.0
      %550 = vmatpush1.msra.mxu0 0.0
      %551 = vmatprep.subr.mxu0 0.0
      %552 = vmatpush1.msra.mxu0 0.0
      %553 = vmatprep.subr.mxu0 0.0
      %554 = vmatpush1.msra.mxu0 0.0
      %555 = vmatprep.subr.mxu0 0.0
      %556 = vmatpush1.msra.mxu0 0.0
      %557 = vmatprep.subr.mxu0 0.0
      %558 = vmatpush1.msra.mxu0 0.0
      %559 = vmatprep.subr.mxu0 0.0
      %560 = vmatpush1.msra.mxu0 0.0
      %561 = vmatprep.subr.mxu0 0.0
      %562 = vmatpush1.msra.mxu0 0.0
      %563 = vmatprep.subr.mxu0 0.0
      %564 = vmatpush1.msra.mxu0 0.0
      %565 = vmatprep.subr.mxu0 0.0
      %566 = vmatpush1.msra.mxu0 0.0
      %567 = vmatprep.subr.mxu0 0.0
      %568 = vmatpush1.msra.mxu0 0.0
      %569 = vmatprep.subr.mxu0 0.0
      %570 = vmatpush1.msra.mxu0 0.0
      %571 = vmatprep.subr.mxu0 0.0
      %572 = vmatpush1.msra.mxu0 0.0
      %573 = vmatprep.subr.mxu0 0.0
      %574 = vmatpush1.msra.mxu0 0.0
      %575 = vmatprep.subr.mxu0 0.0
      %576 = vmatpush1.msra.mxu0 0.0
      %577 = vmatprep.subr.mxu0 0.0
      %578 = vmatpush1.msra.mxu0 0.0
      %579 = vmatprep.subr.mxu0 0.0
      %580 = vmatpush1.msra.mxu0 0.0
      %581 = vmatprep.subr.mxu0 0.0
      %582 = vmatpush1.msra.mxu0 0.0
      %583 = vmatprep.subr.mxu0 0.0
      %584 = vmatpush1.msra.mxu0 0.0
      %585 = vmatprep.subr.mxu0 0.0
      %586 = vmatpush1.msra.mxu0 0.0
      %587 = vmatprep.subr.mxu0 0.0
      %588 = vmatpush1.msra.mxu0 0.0
      %589 = vmatprep.subr.mxu0 0.0
      %590 = vmatpush1.msra.mxu0 0.0
      %591 = vmatprep.subr.mxu0 0.0
      %592 = vmatpush1.msra.mxu0 0.0
      %593 = vmatprep.subr.mxu0 0.0
      %594 = vmatpush1.msra.mxu0 0.0
      %595 = vmatprep.mubr.f32.mxu0 0.0
      %596 = vmatmul.mubr.f32.gmra.mrb[0].mxu0 %v291
      %v597 = vpop.f32.mrb[0].mxu0
      %v598 = vadd.f32 0.0, %v597
      %v599 = vpop.f32.mrb[0].mxu0
      %v600 = vadd.f32 0.0, %v599
      %601 = vdwg.mxu0
      %v602 = vmax.f32 %v385, 0.0
      %v603 = vmax.f32 %v387, 0.0
      %v604 = vmax.f32 %v456, 0.0
      %v605 = vmax.f32 %v458, 0.0
      %v606 = vmax.f32 %v527, 0.0
      %v607 = vmax.f32 %v529, 0.0
      %v608 = vmax.f32 %v598, 0.0
      %v609 = vmax.f32 %v600, 0.0
      %v610 = vld [vmem:[%s2] sm:$0xff]
      %vm611 = vcmask 195584
      %v613 = vsel %vm611, %v610, 0
      %615 = vmatprep.subr.mxu0 0.0
      %616 = vmatpush1.msra.mxu0 0.0
      %617 = vmatprep.subr.mxu0 %v603
      %618 = vmatpush1.msra.mxu0 %v602
      %619 = vmatprep.subr.mxu0 %v605
      %620 = vmatpush1.msra.mxu0 %v604
      %621 = vmatprep.subr.mxu0 0.0
      %622 = vmatpush1.msra.mxu0 0.0
      %623 = vmatprep.subr.mxu0 0.0
      %624 = vmatpush1.msra.mxu0 0.0
      %625 = vmatprep.subr.mxu0 0.0
      %626 = vmatpush1.msra.mxu0 0.0
      %627 = vmatprep.subr.mxu0 0.0
      %628 = vmatpush1.msra.mxu0 0.0
      %629 = vmatprep.subr.mxu0 0.0
      %630 = vmatpush1.msra.mxu0 0.0
      %631 = vmatprep.subr.mxu0 0.0
      %632 = vmatpush1.msra.mxu0 0.0
      %633 = vmatprep.subr.mxu0 0.0
      %634 = vmatpush1.msra.mxu0 0.0
      %635 = vmatprep.subr.mxu0 0.0
      %636 = vmatpush1.msra.mxu0 0.0
      %637 = vmatprep.subr.mxu0 0.0
      %638 = vmatpush1.msra.mxu0 0.0
      %639 = vmatprep.subr.mxu0 0.0
      %640 = vmatpush1.msra.mxu0 0.0
      %641 = vmatprep.subr.mxu0 0.0
      %642 = vmatpush1.msra.mxu0 0.0
      %643 = vmatprep.subr.mxu0 0.0
      %644 = vmatpush1.msra.mxu0 0.0
      %645 = vmatprep.subr.mxu0 0.0
      %646 = vmatpush1.msra.mxu0 0.0
      %647 = vmatprep.subr.mxu0 0.0
      %648 = vmatpush1.msra.mxu0 0.0
      %649 = vmatprep.subr.mxu0 0.0
      %650 = vmatpush1.msra.mxu0 0.0
      %651 = vmatprep.subr.mxu0 0.0
      %652 = vmatpush1.msra.mxu0 0.0
      %653 = vmatprep.subr.mxu0 0.0
      %654 = vmatpush1.msra.mxu0 0.0
      %655 = vmatprep.subr.mxu0 0.0
      %656 = vmatpush1.msra.mxu0 0.0
      %657 = vmatprep.subr.mxu0 0.0
      %658 = vmatpush1.msra.mxu0 0.0
      %659 = vmatprep.subr.mxu0 0.0
      %660 = vmatpush1.msra.mxu0 0.0
      %661 = vmatprep.subr.mxu0 0.0
      %662 = vmatpush1.msra.mxu0 0.0
      %663 = vmatprep.subr.mxu0 0.0
      %664 = vmatpush1.msra.mxu0 0.0
      %665 = vmatprep.subr.mxu0 0.0
      %666 = vmatpush1.msra.mxu0 0.0
      %667 = vmatprep.subr.mxu0 0.0
      %668 = vmatpush1.msra.mxu0 0.0
      %669 = vmatprep.subr.mxu0 0.0
      %670 = vmatpush1.msra.mxu0 0.0
      %671 = vmatprep.subr.mxu0 0.0
      %672 = vmatpush1.msra.mxu0 0.0
      %673 = vmatprep.subr.mxu0 0.0
      %674 = vmatpush1.msra.mxu0 0.0
      %675 = vmatprep.subr.mxu0 0.0
      %676 = vmatpush1.msra.mxu0 0.0
      %677 = vmatprep.subr.mxu0 0.0
      %678 = vmatpush1.msra.mxu0 0.0
      %679 = vmatprep.mubr.f32.mxu0 0.0
      %680 = vmatmul.mubr.f32.gmra.mrb[0].mxu0 %v613
      %v681 = vpop.f32.mrb[0].mxu0
      %v682 = vadd.f32 0.0, %v681
      %v683 = vpop.f32.mrb[0].mxu0
      %v684 = vadd.f32 0.0, %v683
      %685 = vdwg.mxu0
      %686 = vmatprep.subr.mxu0 %v603
      %687 = vmatpush1.msra.mxu0 %v602
      %688 = vmatprep.subr.mxu0 %v605
      %689 = vmatpush1.msra.mxu0 %v604
      %690 = vmatprep.subr.mxu0 %v607
      %691 = vmatpush1.msra.mxu0 %v606
      %692 = vmatprep.subr.mxu0 0.0
      %693 = vmatpush1.msra.mxu0 0.0
      %694 = vmatprep.subr.mxu0 0.0
      %695 = vmatpush1.msra.mxu0 0.0
      %696 = vmatprep.subr.mxu0 0.0
      %697 = vmatpush1.msra.mxu0 0.0
      %698 = vmatprep.subr.mxu0 0.0
      %699 = vmatpush1.msra.mxu0 0.0
      %700 = vmatprep.subr.mxu0 0.0
      %701 = vmatpush1.msra.mxu0 0.0
      %702 = vmatprep.subr.mxu0 0.0
      %703 = vmatpush1.msra.mxu0 0.0
      %704 = vmatprep.subr.mxu0 0.0
      %705 = vmatpush1.msra.mxu0 0.0
      %706 = vmatprep.subr.mxu0 0.0
      %707 = vmatpush1.msra.mxu0 0.0
      %708 = vmatprep.subr.mxu0 0.0
      %709 = vmatpush1.msra.mxu0 0.0
      %710 = vmatprep.subr.mxu0 0.0
      %711 = vmatpush1.msra.mxu0 0.0
      %712 = vmatprep.subr.mxu0 0.0
      %713 = vmatpush1.msra.mxu0 0.0
      %714 = vmatprep.subr.mxu0 0.0
      %715 = vmatpush1.msra.mxu0 0.0
      %716 = vmatprep.subr.mxu0 0.0
      %717 = vmatpush1.msra.mxu0 0.0
      %718 = vmatprep.subr.mxu0 0.0
      %719 = vmatpush1.msra.mxu0 0.0
      %720 = vmatprep.subr.mxu0 0.0
      %721 = vmatpush1.msra.mxu0 0.0
      %722 = vmatprep.subr.mxu0 0.0
      %723 = vmatpush1.msra.mxu0 0.0
      %724 = vmatprep.subr.mxu0 0.0
      %725 = vmatpush1.msra.mxu0 0.0
      %726 = vmatprep.subr.mxu0 0.0
      %727 = vmatpush1.msra.mxu0 0.0
      %728 = vmatprep.subr.mxu0 0.0
      %729 = vmatpush1.msra.mxu0 0.0
      %730 = vmatprep.subr.mxu0 0.0
      %731 = vmatpush1.msra.mxu0 0.0
      %732 = vmatprep.subr.mxu0 0.0
      %733 = vmatpush1.msra.mxu0 0.0
      %734 = vmatprep.subr.mxu0 0.0
      %735 = vmatpush1.msra.mxu0 0.0
      %736 = vmatprep.subr.mxu0 0.0
      %737 = vmatpush1.msra.mxu0 0.0
      %738 = vmatprep.subr.mxu0 0.0
      %739 = vmatpush1.msra.mxu0 0.0
      %740 = vmatprep.subr.mxu0 0.0
      %741 = vmatpush1.msra.mxu0 0.0
      %742 = vmatprep.subr.mxu0 0.0
      %743 = vmatpush1.msra.mxu0 0.0
      %744 = vmatprep.subr.mxu0 0.0
      %745 = vmatpush1.msra.mxu0 0.0
      %746 = vmatprep.subr.mxu0 0.0
      %747 = vmatpush1.msra.mxu0 0.0
      %748 = vmatprep.subr.mxu0 0.0
      %749 = vmatpush1.msra.mxu0 0.0
      %750 = vmatprep.mubr.f32.mxu0 0.0
      %751 = vmatmul.mubr.f32.gmra.mrb[0].mxu0 %v613
      %v752 = vpop.f32.mrb[0].mxu0
      %v753 = vadd.f32 0.0, %v752
      %v754 = vpop.f32.mrb[0].mxu0
      %v755 = vadd.f32 0.0, %v754
      %756 = vdwg.mxu0
      %757 = vmatprep.subr.mxu0 %v605
      %758 = vmatpush1.msra.mxu0 %v604
      %759 = vmatprep.subr.mxu0 %v607
      %760 = vmatpush1.msra.mxu0 %v606
      %761 = vmatprep.subr.mxu0 %v609
      %762 = vmatpush1.msra.mxu0 %v608
      %763 = vmatprep.subr.mxu0 0.0
      %764 = vmatpush1.msra.mxu0 0.0
      %765 = vmatprep.subr.mxu0 0.0
      %766 = vmatpush1.msra.mxu0 0.0
      %767 = vmatprep.subr.mxu0 0.0
      %768 = vmatpush1.msra.mxu0 0.0
      %769 = vmatprep.subr.mxu0 0.0
      %770 = vmatpush1.msra.mxu0 0.0
      %771 = vmatprep.subr.mxu0 0.0
      %772 = vmatpush1.msra.mxu0 0.0
      %773 = vmatprep.subr.mxu0 0.0
      %774 = vmatpush1.msra.mxu0 0.0
      %775 = vmatprep.subr.mxu0 0.0
      %776 = vmatpush1.msra.mxu0 0.0
      %777 = vmatprep.subr.mxu0 0.0
      %778 = vmatpush1.msra.mxu0 0.0
      %779 = vmatprep.subr.mxu0 0.0
      %780 = vmatpush1.msra.mxu0 0.0
      %781 = vmatprep.subr.mxu0 0.0
      %782 = vmatpush1.msra.mxu0 0.0
      %783 = vmatprep.subr.mxu0 0.0
      %784 = vmatpush1.msra.mxu0 0.0
      %785 = vmatprep.subr.mxu0 0.0
      %786 = vmatpush1.msra.mxu0 0.0
      %787 = vmatprep.subr.mxu0 0.0
      %788 = vmatpush1.msra.mxu0 0.0
      %789 = vmatprep.subr.mxu0 0.0
      %790 = vmatpush1.msra.mxu0 0.0
      %791 = vmatprep.subr.mxu0 0.0
      %792 = vmatpush1.msra.mxu0 0.0
      %793 = vmatprep.subr.mxu0 0.0
      %794 = vmatpush1.msra.mxu0 0.0
      %795 = vmatprep.subr.mxu0 0.0
      %796 = vmatpush1.msra.mxu0 0.0
      %797 = vmatprep.subr.mxu0 0.0
      %798 = vmatpush1.msra.mxu0 0.0
      %799 = vmatprep.subr.mxu0 0.0
      %800 = vmatpush1.msra.mxu0 0.0
      %801 = vmatprep.subr.mxu0 0.0
      %802 = vmatpush1.msra.mxu0 0.0
      %803 = vmatprep.subr.mxu0 0.0
      %804 = vmatpush1.msra.mxu0 0.0
      %805 = vmatprep.subr.mxu0 0.0
      %806 = vmatpush1.msra.mxu0 0.0
      %807 = vmatprep.subr.mxu0 0.0
      %808 = vmatpush1.msra.mxu0 0.0
      %809 = vmatprep.subr.mxu0 0.0
      %810 = vmatpush1.msra.mxu0 0.0
      %811 = vmatprep.subr.mxu0 0.0
      %812 = vmatpush1.msra.mxu0 0.0
      %813 = vmatprep.subr.mxu0 0.0
      %814 = vmatpush1.msra.mxu0 0.0
      %815 = vmatprep.subr.mxu0 0.0
      %816 = vmatpush1.msra.mxu0 0.0
      %817 = vmatprep.subr.mxu0 0.0
      %818 = vmatpush1.msra.mxu0 0.0
      %819 = vmatprep.subr.mxu0 0.0
      %820 = vmatpush1.msra.mxu0 0.0
      %821 = vmatprep.mubr.f32.mxu0 0.0
      %822 = vmatmul.mubr.f32.gmra.mrb[0].mxu0 %v613
      %v823 = vpop.f32.mrb[0].mxu0
      %v824 = vadd.f32 0.0, %v823
      %v825 = vpop.f32.mrb[0].mxu0
      %v826 = vadd.f32 0.0, %v825
      %827 = vdwg.mxu0
      %828 = vmatprep.subr.mxu0 %v607
      %829 = vmatpush1.msra.mxu0 %v606
      %830 = vmatprep.subr.mxu0 %v609
      %831 = vmatpush1.msra.mxu0 %v608
      %832 = vmatprep.subr.mxu0 0.0
      %833 = vmatpush1.msra.mxu0 0.0
      %834 = vmatprep.subr.mxu0 0.0
      %835 = vmatpush1.msra.mxu0 0.0
      %836 = vmatprep.subr.mxu0 0.0
      %837 = vmatpush1.msra.mxu0 0.0
      %838 = vmatprep.subr.mxu0 0.0
      %839 = vmatpush1.msra.mxu0 0.0
      %840 = vmatprep.subr.mxu0 0.0
      %841 = vmatpush1.msra.mxu0 0.0
      %842 = vmatprep.subr.mxu0 0.0
      %843 = vmatpush1.msra.mxu0 0.0
      %844 = vmatprep.subr.mxu0 0.0
      %845 = vmatpush1.msra.mxu0 0.0
      %846 = vmatprep.subr.mxu0 0.0
      %847 = vmatpush1.msra.mxu0 0.0
      %848 = vmatprep.subr.mxu0 0.0
      %849 = vmatpush1.msra.mxu0 0.0
      %850 = vmatprep.subr.mxu0 0.0
      %851 = vmatpush1.msra.mxu0 0.0
      %852 = vmatprep.subr.mxu0 0.0
      %853 = vmatpush1.msra.mxu0 0.0
      %854 = vmatprep.subr.mxu0 0.0
      %855 = vmatpush1.msra.mxu0 0.0
      %856 = vmatprep.subr.mxu0 0.0
      %857 = vmatpush1.msra.mxu0 0.0
      %858 = vmatprep.subr.mxu0 0.0
      %859 = vmatpush1.msra.mxu0 0.0
      %860 = vmatprep.subr.mxu0 0.0
      %861 = vmatpush1.msra.mxu0 0.0
      %862 = vmatprep.subr.mxu0 0.0
      %863 = vmatpush1.msra.mxu0 0.0
      %864 = vmatprep.subr.mxu0 0.0
      %865 = vmatpush1.msra.mxu0 0.0
      %866 = vmatprep.subr.mxu0 0.0
      %867 = vmatpush1.msra.mxu0 0.0
      %868 = vmatprep.subr.mxu0 0.0
      %869 = vmatpush1.msra.mxu0 0.0
      %870 = vmatprep.subr.mxu0 0.0
      %871 = vmatpush1.msra.mxu0 0.0
      %872 = vmatprep.subr.mxu0 0.0
      %873 = vmatpush1.msra.mxu0 0.0
      %874 = vmatprep.subr.mxu0 0.0
      %875 = vmatpush1.msra.mxu0 0.0
      %876 = vmatprep.subr.mxu0 0.0
      %877 = vmatpush1.msra.mxu0 0.0
      %878 = vmatprep.subr.mxu0 0.0
      %879 = vmatpush1.msra.mxu0 0.0
      %880 = vmatprep.subr.mxu0 0.0
      %881 = vmatpush1.msra.mxu0 0.0
      %882 = vmatprep.subr.mxu0 0.0
      %883 = vmatpush1.msra.mxu0 0.0
      %884 = vmatprep.subr.mxu0 0.0
      %885 = vmatpush1.msra.mxu0 0.0
      %886 = vmatprep.subr.mxu0 0.0
      %887 = vmatpush1.msra.mxu0 0.0
      %888 = vmatprep.subr.mxu0 0.0
      %889 = vmatpush1.msra.mxu0 0.0
      %890 = vmatprep.subr.mxu0 0.0
      %891 = vmatpush1.msra.mxu0 0.0
      %892 = vmatprep.mubr.f32.mxu0 0.0
      %893 = vmatmul.mubr.f32.gmra.mrb[0].mxu0 %v613
      %v894 = vpop.f32.mrb[0].mxu0
      %v895 = vadd.f32 0.0, %v894
      %v896 = vpop.f32.mrb[0].mxu0
      %v897 = vadd.f32 0.0, %v896
      %898 = vdwg.mxu0
      %v899 = vmax.f32 %v682, 0.0
      %v900 = vmax.f32 %v684, 0.0
      %v901 = vmax.f32 %v753, 0.0
      %v902 = vmax.f32 %v755, 0.0
      %v903 = vmax.f32 %v824, 0.0
      %v904 = vmax.f32 %v826, 0.0
      %v905 = vmax.f32 %v895, 0.0
      %v906 = vmax.f32 %v897, 0.0
      %v907 = vpack.c.bf16 %v602, %v602
      %v908 = vpack.c.bf16 %v603, %v603
      %v909 = vpack.c.bf16 %v604, %v604
      %v910 = vpack.c.bf16 %v605, %v605
      %v911 = vpack.c.bf16 %v606, %v606
      %v912 = vpack.c.bf16 %v607, %v607
      %v913 = vpack.c.bf16 %v608, %v608
      %v914 = vpack.c.bf16 %v609, %v609
      %v923 = vunpack.c.l.b16 %v907
      %v924 = vunpack.c.l.b16 %v908
      %v925 = vunpack.c.l.b16 %v909
      %v926 = vunpack.c.l.b16 %v910
      %v927 = vunpack.c.l.b16 %v911
      %v928 = vunpack.c.l.b16 %v912
      %v929 = vunpack.c.l.b16 %v913
      %v930 = vunpack.c.l.b16 %v914
      %v931 = vpack.c.b16 %v924, %v923
      %v932 = vpack.c.b16 %v926, %v925
      %v933 = vpack.c.b16 %v928, %v927
      %v934 = vpack.c.b16 %v930, %v929
      %939 = vst [vmem:[%s238] sm:$0xff] %v931
      %940 = vst [vmem:[%s238 + $0x8] sm:$0xff] %v932
      %941 = vst [vmem:[%s238 + $0x10] sm:$0xff] %v933
      %942 = vst [vmem:[%s238 + $0x18] sm:$0xff] %v934
      %v943 = vpack.c.bf16 %v899, %v899
      %v944 = vpack.c.bf16 %v900, %v900
      %v945 = vpack.c.bf16 %v901, %v901
      %v946 = vpack.c.bf16 %v902, %v902
      %v947 = vpack.c.bf16 %v903, %v903
      %v948 = vpack.c.bf16 %v904, %v904
      %v949 = vpack.c.bf16 %v905, %v905
      %v950 = vpack.c.bf16 %v906, %v906
      %v959 = vunpack.c.l.b16 %v943
      %v960 = vunpack.c.l.b16 %v944
      %v961 = vunpack.c.l.b16 %v945
      %v962 = vunpack.c.l.b16 %v946
      %v963 = vunpack.c.l.b16 %v947
      %v964 = vunpack.c.l.b16 %v948
      %v965 = vunpack.c.l.b16 %v949
      %v966 = vunpack.c.l.b16 %v950
      %v967 = vpack.c.b16 %v960, %v959
      %v968 = vpack.c.b16 %v962, %v961
      %v969 = vpack.c.b16 %v964, %v963
      %v970 = vpack.c.b16 %v966, %v965
      %975 = vst [vmem:[%s243] sm:$0xff] %v967
      %976 = vst [vmem:[%s243 + $0x8] sm:$0xff] %v968
      %977 = vst [vmem:[%s243 + $0x10] sm:$0xff] %v969
      %978 = vst [vmem:[%s243 + $0x18] sm:$0xff] %v970
      %v979 = vadd.f32 %v602, %v603
      %v980 = vadd.f32 %v979, %v604
      %v981 = vadd.f32 %v980, %v605
      %v982 = vadd.f32 %v981, %v606
      %v983 = vadd.f32 %v982, %v607
      %v984 = vadd.f32 %v983, %v608
      %v985 = vadd.f32 %v984, %v609
      %986 = vadd.xlane.f32.xlu0 %v985
      %v987 = vpop.xlane.xlu0 %986
      %vm988 = vcmask 7168
      %989 = vst.msk [vmem:[%s247] sm:$0xff] %vm988, %v987
      %v990 = vadd.f32 %v899, %v900
      %v991 = vadd.f32 %v990, %v901
      %v992 = vadd.f32 %v991, %v902
      %v993 = vadd.f32 %v992, %v903
      %v994 = vadd.f32 %v993, %v904
      %v995 = vadd.f32 %v994, %v905
      %v996 = vadd.f32 %v995, %v906
      %997 = vadd.xlane.f32.xlu0 %v996
      %v998 = vpop.xlane.xlu0 %997
      %vm999 = vcmask 15368
      %1000 = vst.msk [vmem:[%s247] sm:$0xff] %vm999, %v998
      %v1001 = vmul.f32 %v602, %v602
      %v1002 = vmul.f32 %v603, %v603
      %v1003 = vmul.f32 %v604, %v604
      %v1004 = vmul.f32 %v605, %v605
      %v1005 = vmul.f32 %v606, %v606
      %v1006 = vmul.f32 %v607, %v607
      %v1007 = vmul.f32 %v608, %v608
      %v1008 = vmul.f32 %v609, %v609
      %v1009 = vadd.f32 %v1001, %v1002
      %v1010 = vadd.f32 %v1009, %v1003
      %v1011 = vadd.f32 %v1010, %v1004
      %v1012 = vadd.f32 %v1011, %v1005
      %v1013 = vadd.f32 %v1012, %v1006
      %v1014 = vadd.f32 %v1013, %v1007
      %v1015 = vadd.f32 %v1014, %v1008
      %1016 = vadd.xlane.f32.xlu0 %v1015
      %v1017 = vpop.xlane.xlu0 %1016
      %vm1018 = vcmask 23568
      %1019 = vst.msk [vmem:[%s247] sm:$0xff] %vm1018, %v1017
      %v1020 = vmul.f32 %v899, %v899
      %v1021 = vmul.f32 %v900, %v900
      %v1022 = vmul.f32 %v901, %v901
      %v1023 = vmul.f32 %v902, %v902
      %v1024 = vmul.f32 %v903, %v903
      %v1025 = vmul.f32 %v904, %v904
      %v1026 = vmul.f32 %v905, %v905
      %v1027 = vmul.f32 %v906, %v906
      %v1028 = vadd.f32 %v1020, %v1021
      %v1029 = vadd.f32 %v1028, %v1022
      %v1030 = vadd.f32 %v1029, %v1023
      %v1031 = vadd.f32 %v1030, %v1024
      %v1032 = vadd.f32 %v1031, %v1025
      %v1033 = vadd.f32 %v1032, %v1026
      %v1034 = vadd.f32 %v1033, %v1027
      %1035 = vadd.xlane.f32.xlu0 %v1034
      %v1036 = vpop.xlane.xlu0 %1035
      %vm1037 = vcmask 31768
      %1038 = vst.msk [vmem:[%s247] sm:$0xff] %vm1037, %v1036
      %v1039 = vmul.f32 %v602, %v899
      %v1040 = vmul.f32 %v603, %v900
      %v1041 = vmul.f32 %v604, %v901
      %v1042 = vmul.f32 %v605, %v902
      %v1043 = vmul.f32 %v606, %v903
      %v1044 = vmul.f32 %v607, %v904
      %v1045 = vmul.f32 %v608, %v905
      %v1046 = vmul.f32 %v609, %v906
      %v1047 = vadd.f32 %v1039, %v1040
      %v1048 = vadd.f32 %v1047, %v1041
      %v1049 = vadd.f32 %v1048, %v1042
      %v1050 = vadd.f32 %v1049, %v1043
      %v1051 = vadd.f32 %v1050, %v1044
      %v1052 = vadd.f32 %v1051, %v1045
      %v1053 = vadd.f32 %v1052, %v1046
      %1054 = vadd.xlane.f32.xlu0 %v1053
      %v1055 = vpop.xlane.xlu0 %1054
      %vm1056 = vcmask 39968
      %1057 = vst.msk [vmem:[%s247] sm:$0xff] %vm1056, %v1055
      %p1058 = scmp.lt.s32.totalorder %s17, 1
      %s1059 = scalar_select %p1058, %s17, 1
      %s1060 = smul.addr %s1059, 8
      %s1061 = smul.addr %s1060, 4
      %s1062 = scalar_lea.vmem %s3, %s1061
      %p1063 = scmp.lt.s32.totalorder %s17, 1
      %s1064 = scalar_select %p1063, %s17, 1
      %s1065 = smul.addr %s1064, 8
      %s1066 = smul.addr %s1065, 4
      %s1067 = scalar_lea.vmem %s4, %s1066
      %p1068 = scmp.lt.s32.totalorder %s17, 1
      %s1069 = scalar_select %p1068, %s17, 1
      %s1070 = smul.addr %s1069, 8
      %s1071 = scalar_lea.vmem %s5, %s1070
      // Predicated region
      $region33: #{sssa_forward.2} parent=31 // pred_check
        %p1072 = pneg %p103
      $region34: #{sssa_forward.2} parent=31 // pred_check_branch
        %1074 = sbr.rel (%p1072) target = $region36
      $region35: #{sssa_forward.2} parent=31 // pred_region
        _
      $region36: #{sssa_forward.2} parent=31 // pred_fallthru
        _
      // Predicated region
      $region37: #{sssa_forward.2} parent=31 // pred_check
        %p1075 = pneg %p129
      $region38: #{sssa_forward.2} parent=31 // pred_check_branch
        %1077 = sbr.rel (%p1075) target = $region40
      $region39: #{sssa_forward.2} parent=31 // pred_region
        _
      $region40: #{sssa_forward.2} parent=31 // pred_fallthru
        _
      // Predicated region
      $region41: #{sssa_forward.2} parent=31 // pred_check
        %p1078 = pneg %p155
      $region42: #{sssa_forward.2} parent=31 // pred_check_branch
        %1080 = sbr.rel (%p1078) target = $region44
      $region43: #{sssa_forward.2} parent=31 // pred_region
        _
      $region44: #{sssa_forward.2} parent=31 // pred_fallthru
        _
    $region32: #{sssa_forward.2} parent=5 // pred_fallthru
      _
    %p1081 = scmp.le.s32.totalorder 2, %s12
    // Predicated region
    $region45: #{sssa_forward.2} parent=5 // pred_check
      %p1082 = pneg %p1081
    $region46: #{sssa_forward.2} parent=5 // pred_check_branch
      %1084 = sbr.rel (%p1082) target = $region48
    $region47: #{sssa_forward.2} parent=5 // pred_region
      %s1085 = ssub.s32 %s12, 2
      // Predicated region
      $region49: #{sssa_forward.2} parent=47 // pred_check
        %p1086 = pneg %p109
      $region50: #{sssa_forward.2} parent=47 // pred_check_branch
        %1088 = sbr.rel (%p1086) target = $region52
      $region51: #{sssa_forward.2} parent=47 // pred_region
        %p1089 = scmp.lt.s32.totalorder %s18, 1
        %s1090 = scalar_select %p1089, %s18, 1
        %s1091 = smul.addr %s1090, 8
        %s1092 = smul.addr %s1091, 4
        %s1093 = scalar_lea.vmem %s3, %s1092
      $region52: #{sssa_forward.2} parent=47 // pred_fallthru
        _
      // Predicated region
      $region53: #{sssa_forward.2} parent=47 // pred_check
        %p1094 = pneg %p135
      $region54: #{sssa_forward.2} parent=47 // pred_check_branch
        %1096 = sbr.rel (%p1094) target = $region56
      $region55: #{sssa_forward.2} parent=47 // pred_region
        %p1097 = scmp.lt.s32.totalorder %s18, 1
        %s1098 = scalar_select %p1097, %s18, 1
        %s1099 = smul.addr %s1098, 8
        %s1100 = smul.addr %s1099, 4
        %s1101 = scalar_lea.vmem %s4, %s1100
      $region56: #{sssa_forward.2} parent=47 // pred_fallthru
        _
      // Predicated region
      $region57: #{sssa_forward.2} parent=47 // pred_check
        %p1102 = pneg %p161
      $region58: #{sssa_forward.2} parent=47 // pred_check_branch
        %1104 = sbr.rel (%p1102) target = $region60
      $region59: #{sssa_forward.2} parent=47 // pred_region
        %p1105 = scmp.lt.s32.totalorder %s18, 1
        %s1106 = scalar_select %p1105, %s18, 1
        %s1107 = smul.addr %s1106, 8
        %s1108 = scalar_lea.vmem %s5, %s1107
      $region60: #{sssa_forward.2} parent=47 // pred_fallthru
        _
    $region48: #{sssa_forward.2} parent=5 // pred_fallthru
      _
  $region6: #{sssa_forward.2} parent=0 // loop_footer
    %s16 = sadd.s32 1, %s12
  $region7: #{sssa_forward.2} parent=0 // loop_footer_branch
    %11 = sbr.rel target = $region3
  $region8: #{sssa_forward.2} parent=0 // loop_exit
    _

</llo_original>
